<compile_context>
chip_gen: v6e
topology: v6e:2x2x1
jax: 0.10.0
libtpu: 0.0.40
codegen_flags: <defaults>
</compile_context>

<pallas_src>
import functools

import jax
import jax.numpy as jnp
from jax import lax
from jax.experimental import pallas as pl
from jax.experimental.pallas import tpu as pltpu


def _round_up(x, m):
    return ((x + m - 1) // m) * m


def _erf(x):
    # Abramowitz & Stegun 7.1.26 polynomial erf (|err| < 1.5e-7); built only from
    # ops guaranteed to lower on the TPU VPU/EUP (exp, mul, add, select, recip).
    a1, a2, a3, a4, a5 = 0.254829592, -0.284496736, 1.421413741, -1.453152027, 1.061405429
    p = 0.3275911
    s = jnp.where(x >= 0.0, 1.0, -1.0)
    ax = jnp.abs(x)
    t = 1.0 / (1.0 + p * ax)
    poly = ((((a5 * t + a4) * t + a3) * t + a2) * t + a1) * t
    return s * (1.0 - poly * jnp.exp(-ax * ax))


def _gelu_exact(x):
    # Exact (erf-based) GELU, matching HF ACT2FN["gelu"] / torch F.gelu.
    return 0.5 * x * (1.0 + _erf(x * 0.7071067811865476))


# a[m, k] . b[n, k] -> [m, n]  : contracts the last dim of both operands, so the
# torch Linear weight layout (out, in) is consumed directly (no transpose).
_CONTRACT_LAST = (((1,), (1,)), ((), ()))


def _mlm_head_kernel(x_ref, wd_ref, bd_ref, g_ref, beta_ref,
                     wdec_ref, bdec_ref, o_ref, h_ref, *, eps):
    """Grid point (m, v): token tile m, vocab tile v."""
    v = pl.program_id(1)

    @pl.when(v == 0)
    def _transform():
        # dense: (tile_m, H) x (H, H)^T on the MXU (bf16 operands, f32 accumulation).
        xm = x_ref[...].astype(wd_ref.dtype)
        h = lax.dot_general(xm, wd_ref[...], _CONTRACT_LAST,
                            preferred_element_type=jnp.float32)
        h = h + bd_ref[...].astype(jnp.float32)
        h = _gelu_exact(h)
        # one-pass LayerNorm over the hidden (lane) dim, clamped against
        # E[x^2] - mean^2 cancellation going negative.
        inv_h = 1.0 / h.shape[-1]
        mean = jnp.sum(h, axis=-1, keepdims=True) * inv_h
        var = jnp.sum(h * h, axis=-1, keepdims=True) * inv_h - mean * mean
        var = jnp.maximum(var, 0.0)
        hn = (h - mean) * lax.rsqrt(var + eps)
        hn = hn * g_ref[...].astype(jnp.float32) + beta_ref[...].astype(jnp.float32)
        h_ref[...] = hn.astype(h_ref.dtype)   # cached for all vocab tiles of this m

    # decoder: (tile_m, H) x (tile_v, H)^T on the MXU + tied vocab bias.
    scores = lax.dot_general(h_ref[...], wdec_ref[...], _CONTRACT_LAST,
                             preferred_element_type=jnp.float32)
    scores = scores + bdec_ref[...].astype(jnp.float32)
    o_ref[...] = scores.astype(o_ref.dtype)


def qbert_mlm_head(sequence_output, params, *, eps=1e-12, tile_m=None, tile_v=512,
                   matmul_dtype=jnp.bfloat16):
    """sequence_output: (B, S, H).  Returns prediction scores (B, S, V)."""
    B, S, H = sequence_output.shape
    V = params["decoder_w"].shape[0]
    M = B * S

    x = sequence_output.reshape(M, H)

    # Weights stay in the torch (out, in) layout -- no HBM round-trip transpose.
    # MXU operands are bf16 (native path on v5e/v6e/v7x); accumulation stays f32.
    wd = params["dense_w"].astype(matmul_dtype)        # (H, H)
    wdec = params["decoder_w"].astype(matmul_dtype)    # (V, H)
    bd = params["dense_b"].reshape(1, H).astype(jnp.float32)
    gamma = params["gamma"].reshape(1, H).astype(jnp.float32)
    beta = params["beta"].reshape(1, H).astype(jnp.float32)
    bdec = params["decoder_b"].reshape(1, V).astype(jnp.float32)

    # Generation-aware defaults.
    try:
        vmem_cap = pltpu.get_tpu_info().vmem_capacity_bytes
    except Exception:
        vmem_cap = 64 * 1024 * 1024
    if tile_m is None:
        try:
            kind = jax.devices()[0].device_kind.lower()
        except Exception:
            kind = ""
        # v5e is already compute-bound at 512; v6e/v7x want ~1024 to stay MXU-bound.
        tile_m = 512 if "v5" in kind else 1024

    # Tile sizing: multiples of (8, 128); ragged tail blocks handled via pl.cdiv
    # grids.  Cap tile_m so the "parallel" token axis has >= 2 tiles (megacore).
    tile_m = min(tile_m, _round_up(pl.cdiv(M, 2), 8))
    tile_m = max(8, (tile_m // 8) * 8)
    if V >= 128:
        tile_v = max(128, (min(tile_v, V) // 128) * 128)
    else:
        tile_v = V
    grid = (pl.cdiv(M, tile_m), pl.cdiv(V, tile_v))

    # VMEM budget derived from the actual buffer sizes, capped by the queried
    # per-core capacity (tighter on v7x's 64 MiB/TC).
    bpe_x = x.dtype.itemsize
    bpe_w = jnp.dtype(matmul_dtype).itemsize
    vmem_need = (2 * tile_m * H * bpe_x          # x tiles (double-buffered)
                 + H * H * bpe_w                  # resident dense weight
                 + 3 * H * 4                      # dense bias / gamma / beta
                 + 2 * tile_v * H * bpe_w         # decoder weight tiles
                 + 2 * tile_v * 4                 # decoder bias tiles
                 + 2 * tile_m * tile_v * bpe_x    # output tiles
                 + tile_m * H * bpe_w)            # cached transform scratch
    vmem_limit = int(min(max(2 * vmem_need + (16 << 20), 32 << 20),
                         (3 * vmem_cap) // 4))

    kernel = functools.partial(_mlm_head_kernel, eps=eps)

    def _call(single_buffer_residents):
        # Grid-invariant operands need only one VMEM buffer.
        pm = ({"pipeline_mode": pl.Buffered(1)} if single_buffer_residents else {})
        in_specs = [
            pl.BlockSpec((tile_m, H), lambda m, v: (m, 0)),          # x (once per m)
            pl.BlockSpec((H, H), lambda m, v: (0, 0), **pm),         # dense weight
            pl.BlockSpec((1, H), lambda m, v: (0, 0), **pm),         # dense bias
            pl.BlockSpec((1, H), lambda m, v: (0, 0), **pm),         # LayerNorm gamma
            pl.BlockSpec((1, H), lambda m, v: (0, 0), **pm),         # LayerNorm beta
            pl.BlockSpec((tile_v, H), lambda m, v: (v, 0)),          # decoder weight tile
            pl.BlockSpec((1, tile_v), lambda m, v: (0, v)),          # decoder (tied) bias
        ]
        return pl.pallas_call(
            kernel,
            out_shape=jax.ShapeDtypeStruct((M, V), sequence_output.dtype),
            grid_spec=pltpu.PrefetchScalarGridSpec(
                num_scalar_prefetch=0,
                grid=grid,
                in_specs=in_specs,
                out_specs=pl.BlockSpec((tile_m, tile_v), lambda m, v: (m, v)),
                scratch_shapes=[pltpu.VMEM((tile_m, H), matmul_dtype)],
            ),
            compiler_params=pltpu.CompilerParams(
                dimension_semantics=("parallel", "arbitrary"),
                vmem_limit_bytes=vmem_limit,
            ),
        )(x, wd, bd, gamma, beta, wdec, bdec)

    try:
        out = _call(True)
    except Exception:
        # Older JAX without BlockSpec pipeline_mode support: double-buffer everything.
        out = _call(False)

    return out.reshape(B, S, V)


def _reference(sequence_output, params, eps, matmul_dtype=jnp.float32):
    """Pure-JAX QBertOnlyMLMHead.forward (eval mode).  `matmul_dtype` mirrors the
    kernel's MXU operand precision (f32 accumulation); float32 == exact module."""
    x = sequence_output.astype(jnp.float32)
    wd = params["dense_w"].astype(matmul_dtype)
    wdec = params["decoder_w"].astype(matmul_dtype)
    h = jnp.dot(x.astype(matmul_dtype), wd.T, preferred_element_type=jnp.float32)
    h = h + params["dense_b"].astype(jnp.float32)
    h = jax.nn.gelu(h, approximate=False)                   # exact erf GELU
    mean = jnp.mean(h, axis=-1, keepdims=True)
    var = jnp.mean((h - mean) ** 2, axis=-1, keepdims=True)
    h = (h - mean) * lax.rsqrt(var + eps) * params["gamma"] + params["beta"]
    h = h.astype(matmul_dtype)
    return jnp.dot(h, wdec.T, preferred_element_type=jnp.float32) + params["decoder_b"]


if __name__ == "__main__":
    # Small shapes consistent with the module: batch=2, seq=8, hidden=32, vocab=128.
    B, S, H, V = 2, 8, 32, 128
    eps = 1e-12

    key = jax.random.PRNGKey(0)
    k_x, k_wd, k_bd, k_wdec, k_bdec = jax.random.split(key, 5)

    sequence_output = jax.random.normal(k_x, (B, S, H), dtype=jnp.float32)

    w_scale = 1.0 / jnp.sqrt(H)
    # TODO(synk): config.hidden_act assumed "gelu" (exact erf GELU, the BERT default);
    # other ACT2FN choices (e.g. "gelu_new", "relu") are not wired up here.
    params = {
        "dense_w": jax.random.uniform(k_wd, (H, H), jnp.float32, -w_scale, w_scale),
        "dense_b": jax.random.uniform(k_bd, (H,), jnp.float32, -w_scale, w_scale),
        "gamma": jnp.ones((H,), jnp.float32),     # nn.LayerNorm default init
        "beta": jnp.zeros((H,), jnp.float32),
        "decoder_w": jax.random.uniform(k_wdec, (V, H), jnp.float32, -w_scale, w_scale),
        "decoder_b": jax.random.uniform(k_bdec, (V,), jnp.float32, -0.1, 0.1),
    }

    out = qbert_mlm_head(sequence_output, params, eps=eps)
    out = jax.block_until_ready(out)
    assert out.shape == (B, S, V)

    # Numerics-matched reference (same bf16 MXU operands, f32 accumulation).
    ref_bf16 = _reference(sequence_output, params, eps, matmul_dtype=jnp.bfloat16)
    assert jnp.allclose(out, ref_bf16, atol=2e-3, rtol=2e-3), "mismatch vs bf16-matched reference"

    # Exact f32 module semantics; loose tolerance only covers bf16 MXU rounding.
    ref_f32 = _reference(sequence_output, params, eps, matmul_dtype=jnp.float32)
    assert jnp.allclose(out, ref_f32, atol=5e-2, rtol=5e-2), "mismatch vs f32 reference"

    print("KERNEL_OK")
</pallas_src>

<mosaic_0001>
module attributes {stable_mosaic.version = 11 : i64} {
  func.func @_mlm_head_kernel(%arg0: i32, %arg1: i32, %arg2: memref<8x32xf32, #tpu.memory_space<vmem>>, %arg3: memref<32x32xbf16, #tpu.memory_space<vmem>>, %arg4: memref<1x32xf32, #tpu.memory_space<vmem>>, %arg5: memref<1x32xf32, #tpu.memory_space<vmem>>, %arg6: memref<1x32xf32, #tpu.memory_space<vmem>>, %arg7: memref<128x32xbf16, #tpu.memory_space<vmem>>, %arg8: memref<1x128xf32, #tpu.memory_space<vmem>>, %arg9: memref<8x128xf32, #tpu.memory_space<vmem>>, %arg10: memref<8x32xbf16, #tpu.memory_space<vmem>>) attributes {dimension_semantics = [#tpu.dimension_semantics<parallel>, #tpu.dimension_semantics<arbitrary>], iteration_bounds = array<i64: 2, 1>, scalar_prefetch = 0 : i64, scratch_operands = 1 : i64, tpu.core_type = #tpu.core_type<tc>, window_params = [{transform_indices = @transform_0, window_bounds = array<i64: 8, 32>}, {pipeline_mode = #tpu.pipeline_mode<synchronous>, transform_indices = @transform_1, window_bounds = array<i64: 32, 32>}, {pipeline_mode = #tpu.pipeline_mode<synchronous>, transform_indices = @transform_2, window_bounds = array<i64: 1, 32>}, {pipeline_mode = #tpu.pipeline_mode<synchronous>, transform_indices = @transform_3, window_bounds = array<i64: 1, 32>}, {pipeline_mode = #tpu.pipeline_mode<synchronous>, transform_indices = @transform_4, window_bounds = array<i64: 1, 32>}, {transform_indices = @transform_5, window_bounds = array<i64: 128, 32>}, {transform_indices = @transform_6, window_bounds = array<i64: 1, 128>}, {transform_indices = @transform_7, window_bounds = array<i64: 8, 128>}]} {
    %c0_i32 = arith.constant 0 : i32
    %0 = arith.cmpi eq, %arg1, %c0_i32 : i32
    %1 = arith.extui %0 : i1 to i32
    %c0_i32_0 = arith.constant 0 : i32
    %2 = arith.cmpi ne, %1, %c0_i32_0 : i32
    scf.if %2 {
      %c0_8 = arith.constant 0 : index
      %c0_9 = arith.constant 0 : index
      %10 = vector.load %arg2[%c0_8, %c0_9] : memref<8x32xf32, #tpu.memory_space<vmem>>, vector<8x32xf32>
      %11 = arith.truncf %10 : vector<8x32xf32> to vector<8x32xbf16>
      %c0_10 = arith.constant 0 : index
      %c0_11 = arith.constant 0 : index
      %12 = vector.load %arg3[%c0_10, %c0_11] : memref<32x32xbf16, #tpu.memory_space<vmem>>, vector<32x32xbf16>
      %cst_12 = arith.constant dense<0.000000e+00> : vector<8x32xf32>
      %13 = tpu.matmul %11, %12, %cst_12 {dimension_numbers = #tpu.dot_dimension_numbers<[1], [1], [0], [0], [0, 0, 1, 0], [], []>} : vector<8x32xbf16>, vector<32x32xbf16>, vector<8x32xf32> -> vector<8x32xf32>
      %c0_13 = arith.constant 0 : index
      %c0_14 = arith.constant 0 : index
      %14 = vector.load %arg4[%c0_13, %c0_14] : memref<1x32xf32, #tpu.memory_space<vmem>>, vector<1x32xf32>
      %15 = vector.broadcast %14 : vector<1x32xf32> to vector<8x32xf32>
      %16 = arith.addf %13, %15 : vector<8x32xf32>
      %cst_15 = arith.constant 5.000000e-01 : f32
      %17 = vector.broadcast %cst_15 : f32 to vector<8x32xf32>
      %18 = arith.mulf %17, %16 : vector<8x32xf32>
      %cst_16 = arith.constant 0.707106769 : f32
      %19 = vector.broadcast %cst_16 : f32 to vector<8x32xf32>
      %20 = arith.mulf %16, %19 : vector<8x32xf32>
      %cst_17 = arith.constant 0.000000e+00 : f32
      %21 = vector.broadcast %cst_17 : f32 to vector<8x32xf32>
      %22 = arith.cmpf oge, %20, %21 : vector<8x32xf32>
      %cst_18 = arith.constant 1.000000e+00 : f32
      %cst_19 = arith.constant -1.000000e+00 : f32
      %23 = vector.broadcast %cst_18 : f32 to vector<8x32xf32>
      %24 = vector.broadcast %cst_19 : f32 to vector<8x32xf32>
      %25 = arith.select %22, %23, %24 : vector<8x32xi1>, vector<8x32xf32>
      %26 = math.absf %20 : vector<8x32xf32>
      %cst_20 = arith.constant 0.327591091 : f32
      %27 = vector.broadcast %cst_20 : f32 to vector<8x32xf32>
      %28 = arith.mulf %27, %26 : vector<8x32xf32>
      %cst_21 = arith.constant 1.000000e+00 : f32
      %29 = vector.broadcast %cst_21 : f32 to vector<8x32xf32>
      %30 = arith.addf %29, %28 : vector<8x32xf32>
      %cst_22 = arith.constant 1.000000e+00 : f32
      %31 = vector.broadcast %cst_22 : f32 to vector<8x32xf32>
      %32 = arith.divf %31, %30 : vector<8x32xf32>
      %cst_23 = arith.constant 1.06140542 : f32
      %33 = vector.broadcast %cst_23 : f32 to vector<8x32xf32>
      %34 = arith.mulf %33, %32 : vector<8x32xf32>
      %cst_24 = arith.constant -1.45315206 : f32
      %35 = vector.broadcast %cst_24 : f32 to vector<8x32xf32>
      %36 = arith.addf %34, %35 : vector<8x32xf32>
      %37 = arith.mulf %36, %32 : vector<8x32xf32>
      %cst_25 = arith.constant 1.42141378 : f32
      %38 = vector.broadcast %cst_25 : f32 to vector<8x32xf32>
      %39 = arith.addf %37, %38 : vector<8x32xf32>
      %40 = arith.mulf %39, %32 : vector<8x32xf32>
      %cst_26 = arith.constant -0.284496725 : f32
      %41 = vector.broadcast %cst_26 : f32 to vector<8x32xf32>
      %42 = arith.addf %40, %41 : vector<8x32xf32>
      %43 = arith.mulf %42, %32 : vector<8x32xf32>
      %cst_27 = arith.constant 0.254829586 : f32
      %44 = vector.broadcast %cst_27 : f32 to vector<8x32xf32>
      %45 = arith.addf %43, %44 : vector<8x32xf32>
      %46 = arith.mulf %45, %32 : vector<8x32xf32>
      %cst_28 = arith.constant 0.000000e+00 : f32
      %47 = vector.broadcast %cst_28 : f32 to vector<8x32xf32>
      %48 = arith.subf %47, %26 : vector<8x32xf32>
      %49 = arith.mulf %48, %26 : vector<8x32xf32>
      %50 = math.exp %49 : vector<8x32xf32>
      %51 = arith.mulf %46, %50 : vector<8x32xf32>
      %cst_29 = arith.constant 1.000000e+00 : f32
      %52 = vector.broadcast %cst_29 : f32 to vector<8x32xf32>
      %53 = arith.subf %52, %51 : vector<8x32xf32>
      %54 = arith.mulf %25, %53 : vector<8x32xf32>
      %cst_30 = arith.constant 1.000000e+00 : f32
      %55 = vector.broadcast %cst_30 : f32 to vector<8x32xf32>
      %56 = arith.addf %55, %54 : vector<8x32xf32>
      %57 = arith.mulf %18, %56 : vector<8x32xf32>
      %cst_31 = arith.constant dense<0.000000e+00> : vector<8xf32>
      %58 = vector.multi_reduction <add>, %57, %cst_31 [1] : vector<8x32xf32> to vector<8xf32>
      %59 = vector.shape_cast %58 : vector<8xf32> to vector<8x1xf32>
      %cst_32 = arith.constant 3.125000e-02 : f32
      %60 = vector.broadcast %cst_32 : f32 to vector<8x1xf32>
      %61 = arith.mulf %59, %60 : vector<8x1xf32>
      %62 = arith.mulf %57, %57 : vector<8x32xf32>
      %cst_33 = arith.constant dense<0.000000e+00> : vector<8xf32>
      %63 = vector.multi_reduction <add>, %62, %cst_33 [1] : vector<8x32xf32> to vector<8xf32>
      %64 = vector.shape_cast %63 : vector<8xf32> to vector<8x1xf32>
      %cst_34 = arith.constant 3.125000e-02 : f32
      %65 = vector.broadcast %cst_34 : f32 to vector<8x1xf32>
      %66 = arith.mulf %64, %65 : vector<8x1xf32>
      %67 = arith.mulf %61, %61 : vector<8x1xf32>
      %68 = arith.subf %66, %67 : vector<8x1xf32>
      %cst_35 = arith.constant 0.000000e+00 : f32
      %69 = vector.broadcast %cst_35 : f32 to vector<8x1xf32>
      %70 = arith.maximumf %68, %69 : vector<8x1xf32>
      %71 = vector.broadcast %61 : vector<8x1xf32> to vector<8x32xf32>
      %72 = arith.subf %57, %71 : vector<8x32xf32>
      %cst_36 = arith.constant 9.99999996E-13 : f32
      %73 = vector.broadcast %cst_36 : f32 to vector<8x1xf32>
      %74 = arith.addf %70, %73 : vector<8x1xf32>
      %75 = math.rsqrt %74 : vector<8x1xf32>
      %76 = vector.broadcast %75 : vector<8x1xf32> to vector<8x32xf32>
      %77 = arith.mulf %72, %76 : vector<8x32xf32>
      %c0_37 = arith.constant 0 : index
      %c0_38 = arith.constant 0 : index
      %78 = vector.load %arg5[%c0_37, %c0_38] : memref<1x32xf32, #tpu.memory_space<vmem>>, vector<1x32xf32>
      %79 = vector.broadcast %78 : vector<1x32xf32> to vector<8x32xf32>
      %80 = arith.mulf %77, %79 : vector<8x32xf32>
      %c0_39 = arith.constant 0 : index
      %c0_40 = arith.constant 0 : index
      %81 = vector.load %arg6[%c0_39, %c0_40] : memref<1x32xf32, #tpu.memory_space<vmem>>, vector<1x32xf32>
      %82 = vector.broadcast %81 : vector<1x32xf32> to vector<8x32xf32>
      %83 = arith.addf %80, %82 : vector<8x32xf32>
      %84 = arith.truncf %83 : vector<8x32xf32> to vector<8x32xbf16>
      %c0_41 = arith.constant 0 : index
      %c0_42 = arith.constant 0 : index
      %85 = vector.load %arg10[%c0_41, %c0_42] : memref<8x32xbf16, #tpu.memory_space<vmem>>, vector<8x32xbf16>
      tpu.vector_store %arg10[%c0_41, %c0_42], %84 {strides = array<i32>} : memref<8x32xbf16, #tpu.memory_space<vmem>>, vector<8x32xbf16>,
    } else {
    }
    %c0 = arith.constant 0 : index
    %c0_1 = arith.constant 0 : index
    %3 = vector.load %arg10[%c0, %c0_1] : memref<8x32xbf16, #tpu.memory_space<vmem>>, vector<8x32xbf16>
    %c0_2 = arith.constant 0 : index
    %c0_3 = arith.constant 0 : index
    %4 = vector.load %arg7[%c0_2, %c0_3] : memref<128x32xbf16, #tpu.memory_space<vmem>>, vector<128x32xbf16>
    %cst = arith.constant dense<0.000000e+00> : vector<8x128xf32>
    %5 = tpu.matmul %3, %4, %cst {dimension_numbers = #tpu.dot_dimension_numbers<[1], [1], [0], [0], [0, 0, 1, 0], [], []>} : vector<8x32xbf16>, vector<128x32xbf16>, vector<8x128xf32> -> vector<8x128xf32>
    %c0_4 = arith.constant 0 : index
    %c0_5 = arith.constant 0 : index
    %6 = vector.load %arg8[%c0_4, %c0_5] : memref<1x128xf32, #tpu.memory_space<vmem>>, vector<1x128xf32>
    %7 = vector.broadcast %6 : vector<1x128xf32> to vector<8x128xf32>
    %8 = arith.addf %5, %7 : vector<8x128xf32>
    %c0_6 = arith.constant 0 : index
    %c0_7 = arith.constant 0 : index
    %9 = vector.load %arg9[%c0_6, %c0_7] : memref<8x128xf32, #tpu.memory_space<vmem>>, vector<8x128xf32>
    tpu.vector_store %arg9[%c0_6, %c0_7], %8 {strides = array<i32>} : memref<8x128xf32, #tpu.memory_space<vmem>>, vector<8x128xf32>,
    return
  }
  func.func @transform_0(%arg0: i32, %arg1: i32) -> (i32, i32) {
    %c0_i32 = arith.constant 0 : i32
    %c0_i32_0 = arith.constant 0 : i32
    return %arg0, %c0_i32 : i32, i32
  }
  func.func @transform_1(%arg0: i32, %arg1: i32) -> (i32, i32) {
    %c0_i32 = arith.constant 0 : i32
    %c0_i32_0 = arith.constant 0 : i32
    %c0_i32_1 = arith.constant 0 : i32
    return %c0_i32, %c0_i32_0 : i32, i32
  }
  func.func @transform_2(%arg0: i32, %arg1: i32) -> (i32, i32) {
    %c0_i32 = arith.constant 0 : i32
    %c0_i32_0 = arith.constant 0 : i32
    %c0_i32_1 = arith.constant 0 : i32
    return %c0_i32, %c0_i32_0 : i32, i32
  }
  func.func @transform_3(%arg0: i32, %arg1: i32) -> (i32, i32) {
    %c0_i32 = arith.constant 0 : i32
    %c0_i32_0 = arith.constant 0 : i32
    %c0_i32_1 = arith.constant 0 : i32
    return %c0_i32, %c0_i32_0 : i32, i32
  }
  func.func @transform_4(%arg0: i32, %arg1: i32) -> (i32, i32) {
    %c0_i32 = arith.constant 0 : i32
    %c0_i32_0 = arith.constant 0 : i32
    %c0_i32_1 = arith.constant 0 : i32
    return %c0_i32, %c0_i32_0 : i32, i32
  }
  func.func @transform_5(%arg0: i32, %arg1: i32) -> (i32, i32) {
    %c0_i32 = arith.constant 0 : i32
    %c0_i32_0 = arith.constant 0 : i32
    return %arg1, %c0_i32 : i32, i32
  }
  func.func @transform_6(%arg0: i32, %arg1: i32) -> (i32, i32) {
    %c0_i32 = arith.constant 0 : i32
    %c0_i32_0 = arith.constant 0 : i32
    return %c0_i32, %arg1 : i32, i32
  }
  func.func @transform_7(%arg0: i32, %arg1: i32) -> (i32, i32) {
    %c0_i32 = arith.constant 0 : i32
    return %arg0, %arg1 : i32, i32
  }
}

module attributes {stable_mosaic.version = 11 : i64} {
  func.func @_mlm_head_kernel(%arg0: i32, %arg1: i32, %arg2: memref<8x32xf32, #tpu.memory_space<vmem>>, %arg3: memref<32x32xbf16, #tpu.memory_space<vmem>>, %arg4: memref<1x32xf32, #tpu.memory_space<vmem>>, %arg5: memref<1x32xf32, #tpu.memory_space<vmem>>, %arg6: memref<1x32xf32, #tpu.memory_space<vmem>>, %arg7: memref<128x32xbf16, #tpu.memory_space<vmem>>, %arg8: memref<1x128xf32, #tpu.memory_space<vmem>>, %arg9: memref<8x128xf32, #tpu.memory_space<vmem>>, %arg10: memref<8x32xbf16, #tpu.memory_space<vmem>>) attributes {dimension_semantics = [#tpu.dimension_semantics<parallel>, #tpu.dimension_semantics<arbitrary>], iteration_bounds = array<i64: 2, 1>, scalar_prefetch = 0 : i64, scratch_operands = 1 : i64, tpu.core_type = #tpu.core_type<tc>, window_params = [{transform_indices = @transform_0, window_bounds = array<i64: 8, 32>}, {pipeline_mode = #tpu.pipeline_mode<synchronous>, transform_indices = @transform_1, window_bounds = array<i64: 32, 32>}, {pipeline_mode = #tpu.pipeline_mode<synchronous>, transform_indices = @transform_2, window_bounds = array<i64: 1, 32>}, {pipeline_mode = #tpu.pipeline_mode<synchronous>, transform_indices = @transform_3, window_bounds = array<i64: 1, 32>}, {pipeline_mode = #tpu.pipeline_mode<synchronous>, transform_indices = @transform_4, window_bounds = array<i64: 1, 32>}, {transform_indices = @transform_5, window_bounds = array<i64: 128, 32>}, {transform_indices = @transform_6, window_bounds = array<i64: 1, 128>}, {transform_indices = @transform_7, window_bounds = array<i64: 8, 128>}]} {
    %c0_i32 = arith.constant 0 : i32
    %0 = arith.cmpi eq, %arg1, %c0_i32 : i32
    %1 = arith.extui %0 : i1 to i32
    %c0_i32_0 = arith.constant 0 : i32
    %2 = arith.cmpi ne, %1, %c0_i32_0 : i32
    scf.if %2 {
      %c0_8 = arith.constant 0 : index
      %c0_9 = arith.constant 0 : index
      %10 = vector.load %arg2[%c0_8, %c0_9] : memref<8x32xf32, #tpu.memory_space<vmem>>, vector<8x32xf32>
      %11 = arith.truncf %10 : vector<8x32xf32> to vector<8x32xbf16>
      %c0_10 = arith.constant 0 : index
      %c0_11 = arith.constant 0 : index
      %12 = vector.load %arg3[%c0_10, %c0_11] : memref<32x32xbf16, #tpu.memory_space<vmem>>, vector<32x32xbf16>
      %cst_12 = arith.constant dense<0.000000e+00> : vector<8x32xf32>
      %13 = tpu.matmul %11, %12, %cst_12 {dimension_numbers = #tpu.dot_dimension_numbers<[1], [1], [0], [0], [0, 0, 1, 0], [], []>} : vector<8x32xbf16>, vector<32x32xbf16>, vector<8x32xf32> -> vector<8x32xf32>
      %c0_13 = arith.constant 0 : index
      %c0_14 = arith.constant 0 : index
      %14 = vector.load %arg4[%c0_13, %c0_14] : memref<1x32xf32, #tpu.memory_space<vmem>>, vector<1x32xf32>
      %15 = vector.broadcast %14 : vector<1x32xf32> to vector<8x32xf32>
      %16 = arith.addf %13, %15 : vector<8x32xf32>
      %cst_15 = arith.constant 5.000000e-01 : f32
      %17 = vector.broadcast %cst_15 : f32 to vector<8x32xf32>
      %18 = arith.mulf %17, %16 : vector<8x32xf32>
      %cst_16 = arith.constant 0.707106769 : f32
      %19 = vector.broadcast %cst_16 : f32 to vector<8x32xf32>
      %20 = arith.mulf %16, %19 : vector<8x32xf32>
      %cst_17 = arith.constant 0.000000e+00 : f32
      %21 = vector.broadcast %cst_17 : f32 to vector<8x32xf32>
      %22 = arith.cmpf oge, %20, %21 : vector<8x32xf32>
      %cst_18 = arith.constant 1.000000e+00 : f32
      %cst_19 = arith.constant -1.000000e+00 : f32
      %23 = vector.broadcast %cst_18 : f32 to vector<8x32xf32>
      %24 = vector.broadcast %cst_19 : f32 to vector<8x32xf32>
      %25 = arith.select %22, %23, %24 : vector<8x32xi1>, vector<8x32xf32>
      %26 = math.absf %20 : vector<8x32xf32>
      %cst_20 = arith.constant 0.327591091 : f32
      %27 = vector.broadcast %cst_20 : f32 to vector<8x32xf32>
      %28 = arith.mulf %27, %26 : vector<8x32xf32>
      %cst_21 = arith.constant 1.000000e+00 : f32
      %29 = vector.broadcast %cst_21 : f32 to vector<8x32xf32>
      %30 = arith.addf %29, %28 : vector<8x32xf32>
      %cst_22 = arith.constant 1.000000e+00 : f32
      %31 = vector.broadcast %cst_22 : f32 to vector<8x32xf32>
      %32 = arith.divf %31, %30 : vector<8x32xf32>
      %cst_23 = arith.constant 1.06140542 : f32
      %33 = vector.broadcast %cst_23 : f32 to vector<8x32xf32>
      %34 = arith.mulf %33, %32 : vector<8x32xf32>
      %cst_24 = arith.constant -1.45315206 : f32
      %35 = vector.broadcast %cst_24 : f32 to vector<8x32xf32>
      %36 = arith.addf %34, %35 : vector<8x32xf32>
      %37 = arith.mulf %36, %32 : vector<8x32xf32>
      %cst_25 = arith.constant 1.42141378 : f32
      %38 = vector.broadcast %cst_25 : f32 to vector<8x32xf32>
      %39 = arith.addf %37, %38 : vector<8x32xf32>
      %40 = arith.mulf %39, %32 : vector<8x32xf32>
      %cst_26 = arith.constant -0.284496725 : f32
      %41 = vector.broadcast %cst_26 : f32 to vector<8x32xf32>
      %42 = arith.addf %40, %41 : vector<8x32xf32>
      %43 = arith.mulf %42, %32 : vector<8x32xf32>
      %cst_27 = arith.constant 0.254829586 : f32
      %44 = vector.broadcast %cst_27 : f32 to vector<8x32xf32>
      %45 = arith.addf %43, %44 : vector<8x32xf32>
      %46 = arith.mulf %45, %32 : vector<8x32xf32>
      %cst_28 = arith.constant 0.000000e+00 : f32
      %47 = vector.broadcast %cst_28 : f32 to vector<8x32xf32>
      %48 = arith.subf %47, %26 : vector<8x32xf32>
      %49 = arith.mulf %48, %26 : vector<8x32xf32>
      %50 = math.exp %49 : vector<8x32xf32>
      %51 = arith.mulf %46, %50 : vector<8x32xf32>
      %cst_29 = arith.constant 1.000000e+00 : f32
      %52 = vector.broadcast %cst_29 : f32 to vector<8x32xf32>
      %53 = arith.subf %52, %51 : vector<8x32xf32>
      %54 = arith.mulf %25, %53 : vector<8x32xf32>
      %cst_30 = arith.constant 1.000000e+00 : f32
      %55 = vector.broadcast %cst_30 : f32 to vector<8x32xf32>
      %56 = arith.addf %55, %54 : vector<8x32xf32>
      %57 = arith.mulf %18, %56 : vector<8x32xf32>
      %cst_31 = arith.constant dense<0.000000e+00> : vector<8xf32>
      %58 = vector.multi_reduction <add>, %57, %cst_31 [1] : vector<8x32xf32> to vector<8xf32>
      %59 = vector.shape_cast %58 : vector<8xf32> to vector<8x1xf32>
      %cst_32 = arith.constant 3.125000e-02 : f32
      %60 = vector.broadcast %cst_32 : f32 to vector<8x1xf32>
      %61 = arith.mulf %59, %60 : vector<8x1xf32>
      %62 = arith.mulf %57, %57 : vector<8x32xf32>
      %cst_33 = arith.constant dense<0.000000e+00> : vector<8xf32>
      %63 = vector.multi_reduction <add>, %62, %cst_33 [1] : vector<8x32xf32> to vector<8xf32>
      %64 = vector.shape_cast %63 : vector<8xf32> to vector<8x1xf32>
      %cst_34 = arith.constant 3.125000e-02 : f32
      %65 = vector.broadcast %cst_34 : f32 to vector<8x1xf32>
      %66 = arith.mulf %64, %65 : vector<8x1xf32>
      %67 = arith.mulf %61, %61 : vector<8x1xf32>
      %68 = arith.subf %66, %67 : vector<8x1xf32>
      %cst_35 = arith.constant 0.000000e+00 : f32
      %69 = vector.broadcast %cst_35 : f32 to vector<8x1xf32>
      %70 = arith.maximumf %68, %69 : vector<8x1xf32>
      %71 = vector.broadcast %61 : vector<8x1xf32> to vector<8x32xf32>
      %72 = arith.subf %57, %71 : vector<8x32xf32>
      %cst_36 = arith.constant 9.99999996E-13 : f32
      %73 = vector.broadcast %cst_36 : f32 to vector<8x1xf32>
      %74 = arith.addf %70, %73 : vector<8x1xf32>
      %75 = math.rsqrt %74 : vector<8x1xf32>
      %76 = vector.broadcast %75 : vector<8x1xf32> to vector<8x32xf32>
      %77 = arith.mulf %72, %76 : vector<8x32xf32>
      %c0_37 = arith.constant 0 : index
      %c0_38 = arith.constant 0 : index
      %78 = vector.load %arg5[%c0_37, %c0_38] : memref<1x32xf32, #tpu.memory_space<vmem>>, vector<1x32xf32>
      %79 = vector.broadcast %78 : vector<1x32xf32> to vector<8x32xf32>
      %80 = arith.mulf %77, %79 : vector<8x32xf32>
      %c0_39 = arith.constant 0 : index
      %c0_40 = arith.constant 0 : index
      %81 = vector.load %arg6[%c0_39, %c0_40] : memref<1x32xf32, #tpu.memory_space<vmem>>, vector<1x32xf32>
      %82 = vector.broadcast %81 : vector<1x32xf32> to vector<8x32xf32>
      %83 = arith.addf %80, %82 : vector<8x32xf32>
      %84 = arith.truncf %83 : vector<8x32xf32> to vector<8x32xbf16>
      %c0_41 = arith.constant 0 : index
      %c0_42 = arith.constant 0 : index
      %85 = vector.load %arg10[%c0_41, %c0_42] : memref<8x32xbf16, #tpu.memory_space<vmem>>, vector<8x32xbf16>
      tpu.vector_store %arg10[%c0_41, %c0_42], %84 {strides = array<i32>} : memref<8x32xbf16, #tpu.memory_space<vmem>>, vector<8x32xbf16>,
    } else {
    }
    %c0 = arith.constant 0 : index
    %c0_1 = arith.constant 0 : index
    %3 = vector.load %arg10[%c0, %c0_1] : memref<8x32xbf16, #tpu.memory_space<vmem>>, vector<8x32xbf16>
    %c0_2 = arith.constant 0 : index
    %c0_3 = arith.constant 0 : index
    %4 = vector.load %arg7[%c0_2, %c0_3] : memref<128x32xbf16, #tpu.memory_space<vmem>>, vector<128x32xbf16>
    %cst = arith.constant dense<0.000000e+00> : vector<8x128xf32>
    %5 = tpu.matmul %3, %4, %cst {dimension_numbers = #tpu.dot_dimension_numbers<[1], [1], [0], [0], [0, 0, 1, 0], [], []>} : vector<8x32xbf16>, vector<128x32xbf16>, vector<8x128xf32> -> vector<8x128xf32>
    %c0_4 = arith.constant 0 : index
    %c0_5 = arith.constant 0 : index
    %6 = vector.load %arg8[%c0_4, %c0_5] : memref<1x128xf32, #tpu.memory_space<vmem>>, vector<1x128xf32>
    %7 = vector.broadcast %6 : vector<1x128xf32> to vector<8x128xf32>
    %8 = arith.addf %5, %7 : vector<8x128xf32>
    %c0_6 = arith.constant 0 : index
    %c0_7 = arith.constant 0 : index
    %9 = vector.load %arg9[%c0_6, %c0_7] : memref<8x128xf32, #tpu.memory_space<vmem>>, vector<8x128xf32>
    tpu.vector_store %arg9[%c0_6, %c0_7], %8 {strides = array<i32>} : memref<8x128xf32, #tpu.memory_space<vmem>>, vector<8x128xf32>,
    return
  }
  func.func @transform_0(%arg0: i32, %arg1: i32) -> (i32, i32) {
    %c0_i32 = arith.constant 0 : i32
    %c0_i32_0 = arith.constant 0 : i32
    return %arg0, %c0_i32 : i32, i32
  }
  func.func @transform_1(%arg0: i32, %arg1: i32) -> (i32, i32) {
    %c0_i32 = arith.constant 0 : i32
    %c0_i32_0 = arith.constant 0 : i32
    %c0_i32_1 = arith.constant 0 : i32
    return %c0_i32, %c0_i32_0 : i32, i32
  }
  func.func @transform_2(%arg0: i32, %arg1: i32) -> (i32, i32) {
    %c0_i32 = arith.constant 0 : i32
    %c0_i32_0 = arith.constant 0 : i32
    %c0_i32_1 = arith.constant 0 : i32
    return %c0_i32, %c0_i32_0 : i32, i32
  }
  func.func @transform_3(%arg0: i32, %arg1: i32) -> (i32, i32) {
    %c0_i32 = arith.constant 0 : i32
    %c0_i32_0 = arith.constant 0 : i32
    %c0_i32_1 = arith.constant 0 : i32
    return %c0_i32, %c0_i32_0 : i32, i32
  }
  func.func @transform_4(%arg0: i32, %arg1: i32) -> (i32, i32) {
    %c0_i32 = arith.constant 0 : i32
    %c0_i32_0 = arith.constant 0 : i32
    %c0_i32_1 = arith.constant 0 : i32
    return %c0_i32, %c0_i32_0 : i32, i32
  }
  func.func @transform_5(%arg0: i32, %arg1: i32) -> (i32, i32) {
    %c0_i32 = arith.constant 0 : i32
    %c0_i32_0 = arith.constant 0 : i32
    return %arg1, %c0_i32 : i32, i32
  }
  func.func @transform_6(%arg0: i32, %arg1: i32) -> (i32, i32) {
    %c0_i32 = arith.constant 0 : i32
    %c0_i32_0 = arith.constant 0 : i32
    return %c0_i32, %arg1 : i32, i32
  }
  func.func @transform_7(%arg0: i32, %arg1: i32) -> (i32, i32) {
    %c0_i32 = arith.constant 0 : i32
    return %arg0, %arg1 : i32, i32
  }
}

</mosaic_0001>

<llo_original>
// kernel: tpu_custom_call.1
$region0: #{tpu_custom_call.1}
  #allocation0 [shape = 'u32[]', space=smem, size = 0x4, offset = 0x4, fixed_abs, tag = 'smem constant byte address 0x4 - core index']
  #allocation1 [shape = 'u32[144,128]{1,0:T(1,128)}', space=vmem, size = 0x12000, scoped, tag = 'internal scratch']
  #allocation2 [shape = 'bf16[8,32]{1,0:T(8,128)(2,1)}', space=vmem, size = 0x800, scoped, tag = 'scratch operand']
  %s0 = inlined_call_operand.vmem [shape: f32[16,32], index: 0, kind: input, shape index: {}]
  %s1 = inlined_call_operand.vmem [shape: bf16[32,32], index: 1, kind: input, shape index: {}]
  %s2 = inlined_call_operand.vmem [shape: f32[1,32], index: 2, kind: input, shape index: {}]
  %s3 = inlined_call_operand.vmem [shape: f32[1,32], index: 3, kind: input, shape index: {}]
  %s4 = inlined_call_operand.vmem [shape: f32[1,32], index: 4, kind: input, shape index: {}]
  %s5 = inlined_call_operand.vmem [shape: bf16[128,32], index: 5, kind: input, shape index: {}]
  %s6 = inlined_call_operand.vmem [shape: f32[1,128], index: 6, kind: input, shape index: {}]
  %s7 = inlined_call_operand.hbm [shape: f32[16,128], index: 7, kind: output, shape index: {}]
  %s8 = sld [smem:[#allocation0]]
  $region65: #{tpu_custom_call.1} parent=0
    _
  %s10 = ssub.s32 1, %s8
  %s11 = scalar_select 0, %s10, %s8
  $region1: #{tpu_custom_call.1} parent=0
    #allocation3 [shape = 'u8[8192]{0}', space=vmem, size = 0x2000, scoped, tag = 'output window, operand 0']
    #allocation4 [shape = 's32[2]{0}', space=sflag, size = 0x8, scoped, tag = 'scoped memory for tpu_custom_call.1']
    %12 = vsyncpa [#allocation4], 0
    %s13 = scalar_lea.sflag [#allocation4], 1
    %14 = vsyncpa %s13, 0
    loop: start=0, step=1, limit=4
    $region2: #{tpu_custom_call.1} parent=1 // loop_pre_header
      _
    $region3: #{tpu_custom_call.1} parent=1 // loop_header
      %s16 = sphi 0, %s20
      %p17 = scmp.ge.s32.totalorder %s16, 4
      %s23 = sphi 0, %s35
      %s24 = sphi 0, %s31
      %s25 = sphi 0, %s23
      %s26 = sphi 0, %s24
      %s27 = sphi 0, %s25
      %s28 = sphi 0, %s26
      %s38 = sphi 0, %s40
      %s41 = sphi 0, %s38
      %s42 = sphi 0, %s41
      %s58 = sphi 0, %s42
      %s62 = sphi 0, %s62
      %s64 = sphi 0, %s62
      %s65 = sphi 0, %s64
      %s79 = sphi 0, %s65
      %s83 = sphi 0, %s83
      %s85 = sphi 0, %s83
      %s86 = sphi 0, %s85
      %s100 = sphi 0, %s86
      %s104 = sphi 0, %s104
      %s106 = sphi 0, %s104
      %s107 = sphi 0, %s106
      %s121 = sphi 0, %s107
      %s125 = sphi 0, %s125
      %s127 = sphi 0, %s125
      %s128 = sphi 0, %s127
      %s142 = sphi 0, %s128
      %s148 = sphi 0, %s150
      %s151 = sphi 0, %s148
      %s152 = sphi 0, %s151
      %s168 = sphi 0, %s152
      %s174 = sphi 0, %s176
      %s177 = sphi 0, %s174
      %s178 = sphi 0, %s177
      %s194 = sphi 0, %s178
      %s202 = sphi 0, %s204
      %s205 = sphi 0, %s202
      %s206 = sphi 0, %s205
      %s222 = sphi 0, %s206
    $region4: #{tpu_custom_call.1} parent=1 // loop_header_branch
      %19 = sbr.rel (%p17) target = $region8
    $region5: #{tpu_custom_call.1} parent=1 // loop_body
      %s21 = ssub.s32 %s16, 1
      %s22 = ssub.s32 %s16, 2
      %s29 = sadd.s32 1, %s24
      %p30 = scmp.ge.s32.totalorder %s29, 1
      %s31 = scalar_select %p30, 0, %s29
      %s32 = sadd.s32 1, %s23
      %s33 = scalar_select %p30, %s32, %s23
      %p34 = scmp.ge.s32.totalorder %s33, 2
      %s35 = scalar_select %p34, 0, %s33
      %s36 = ssub.s32 %s23, %s35
      %p37 = scmp.eq.s32.totalorder %s36, 0
      %s39 = sadd.s32 %s38, 1
      %s40 = scalar_select %p37, %s38, %s39
      %p43 = pneg %p37
      %p44 = scmp.eq.s32.totalorder %s16, 1
      %p45 = por %p43, %p44
      %p46 = scmp.ne.s32.totalorder %s38, %s41
      %p47 = scmp.eq.s32.totalorder %s16, 0
      %p48 = por %p46, %p47
      %p49 = scmp.ne.s32.totalorder %s38, %s41
      %p50 = scmp.eq.s32.totalorder %s21, 1
      %p51 = por %p49, %p50
      %p52 = scmp.ne.s32.totalorder %s41, %s42
      %p53 = scmp.eq.s32.totalorder %s21, 0
      %p54 = por %p52, %p53
      %p55 = scmp.ne.s32.totalorder %s41, %s42
      %p56 = scmp.eq.s32.totalorder %s22, 1
      %p57 = por %p55, %p56
      %p59 = scmp.ne.s32.totalorder %s42, %s58
      %p60 = scmp.eq.s32.totalorder %s22, 0
      %p61 = por %p59, %p60
      %s63 = sadd.s32 %s62, 1
      %p66 = scmp.eq.s32.totalorder %s16, 1
      %p67 = scmp.ne.s32.totalorder %s62, %s64
      %p68 = scmp.eq.s32.totalorder %s16, 0
      %p69 = por %p67, %p68
      %p70 = scmp.ne.s32.totalorder %s62, %s64
      %p71 = scmp.eq.s32.totalorder %s21, 1
      %p72 = por %p70, %p71
      %p73 = scmp.ne.s32.totalorder %s64, %s65
      %p74 = scmp.eq.s32.totalorder %s21, 0
      %p75 = por %p73, %p74
      %p76 = scmp.ne.s32.totalorder %s64, %s65
      %p77 = scmp.eq.s32.totalorder %s22, 1
      %p78 = por %p76, %p77
      %p80 = scmp.ne.s32.totalorder %s65, %s79
      %p81 = scmp.eq.s32.totalorder %s22, 0
      %p82 = por %p80, %p81
      %s84 = sadd.s32 %s83, 1
      %p87 = scmp.eq.s32.totalorder %s16, 1
      %p88 = scmp.ne.s32.totalorder %s83, %s85
      %p89 = scmp.eq.s32.totalorder %s16, 0
      %p90 = por %p88, %p89
      %p91 = scmp.ne.s32.totalorder %s83, %s85
      %p92 = scmp.eq.s32.totalorder %s21, 1
      %p93 = por %p91, %p92
      %p94 = scmp.ne.s32.totalorder %s85, %s86
      %p95 = scmp.eq.s32.totalorder %s21, 0
      %p96 = por %p94, %p95
      %p97 = scmp.ne.s32.totalorder %s85, %s86
      %p98 = scmp.eq.s32.totalorder %s22, 1
      %p99 = por %p97, %p98
      %p101 = scmp.ne.s32.totalorder %s86, %s100
      %p102 = scmp.eq.s32.totalorder %s22, 0
      %p103 = por %p101, %p102
      %s105 = sadd.s32 %s104, 1
      %p108 = scmp.eq.s32.totalorder %s16, 1
      %p109 = scmp.ne.s32.totalorder %s104, %s106
      %p110 = scmp.eq.s32.totalorder %s16, 0
      %p111 = por %p109, %p110
      %p112 = scmp.ne.s32.totalorder %s104, %s106
      %p113 = scmp.eq.s32.totalorder %s21, 1
      %p114 = por %p112, %p113
      %p115 = scmp.ne.s32.totalorder %s106, %s107
      %p116 = scmp.eq.s32.totalorder %s21, 0
      %p117 = por %p115, %p116
      %p118 = scmp.ne.s32.totalorder %s106, %s107
      %p119 = scmp.eq.s32.totalorder %s22, 1
      %p120 = por %p118, %p119
      %p122 = scmp.ne.s32.totalorder %s107, %s121
      %p123 = scmp.eq.s32.totalorder %s22, 0
      %p124 = por %p122, %p123
      %s126 = sadd.s32 %s125, 1
      %p129 = scmp.eq.s32.totalorder %s16, 1
      %p130 = scmp.ne.s32.totalorder %s125, %s127
      %p131 = scmp.eq.s32.totalorder %s16, 0
      %p132 = por %p130, %p131
      %p133 = scmp.ne.s32.totalorder %s125, %s127
      %p134 = scmp.eq.s32.totalorder %s21, 1
      %p135 = por %p133, %p134
      %p136 = scmp.ne.s32.totalorder %s127, %s128
      %p137 = scmp.eq.s32.totalorder %s21, 0
      %p138 = por %p136, %p137
      %p139 = scmp.ne.s32.totalorder %s127, %s128
      %p140 = scmp.eq.s32.totalorder %s22, 1
      %p141 = por %p139, %p140
      %p143 = scmp.ne.s32.totalorder %s128, %s142
      %p144 = scmp.eq.s32.totalorder %s22, 0
      %p145 = por %p143, %p144
      %s146 = ssub.s32 %s24, %s31
      %p147 = scmp.eq.s32.totalorder %s146, 0
      %s149 = sadd.s32 %s148, 1
      %s150 = scalar_select %p147, %s148, %s149
      %p153 = pneg %p147
      %p154 = scmp.eq.s32.totalorder %s16, 1
      %p155 = por %p153, %p154
      %p156 = scmp.ne.s32.totalorder %s148, %s151
      %p157 = scmp.eq.s32.totalorder %s16, 0
      %p158 = por %p156, %p157
      %p159 = scmp.ne.s32.totalorder %s148, %s151
      %p160 = scmp.eq.s32.totalorder %s21, 1
      %p161 = por %p159, %p160
      %p162 = scmp.ne.s32.totalorder %s151, %s152
      %p163 = scmp.eq.s32.totalorder %s21, 0
      %p164 = por %p162, %p163
      %p165 = scmp.ne.s32.totalorder %s151, %s152
      %p166 = scmp.eq.s32.totalorder %s22, 1
      %p167 = por %p165, %p166
      %p169 = scmp.ne.s32.totalorder %s152, %s168
      %p170 = scmp.eq.s32.totalorder %s22, 0
      %p171 = por %p169, %p170
      %s172 = ssub.s32 %s24, %s31
      %p173 = scmp.eq.s32.totalorder %s172, 0
      %s175 = sadd.s32 %s174, 1
      %s176 = scalar_select %p173, %s174, %s175
      %p179 = pneg %p173
      %p180 = scmp.eq.s32.totalorder %s16, 1
      %p181 = por %p179, %p180
      %p182 = scmp.ne.s32.totalorder %s174, %s177
      %p183 = scmp.eq.s32.totalorder %s16, 0
      %p184 = por %p182, %p183
      %p185 = scmp.ne.s32.totalorder %s174, %s177
      %p186 = scmp.eq.s32.totalorder %s21, 1
      %p187 = por %p185, %p186
      %p188 = scmp.ne.s32.totalorder %s177, %s178
      %p189 = scmp.eq.s32.totalorder %s21, 0
      %p190 = por %p188, %p189
      %p191 = scmp.ne.s32.totalorder %s177, %s178
      %p192 = scmp.eq.s32.totalorder %s22, 1
      %p193 = por %p191, %p192
      %p195 = scmp.ne.s32.totalorder %s178, %s194
      %p196 = scmp.eq.s32.totalorder %s22, 0
      %p197 = por %p195, %p196
      %s198 = ssub.s32 %s23, %s35
      %s199 = ssub.s32 %s24, %s31
      %s200 = sor.u32 %s198, %s199
      %p201 = scmp.eq.s32.totalorder %s200, 0
      %s203 = sadd.s32 %s202, 1
      %s204 = scalar_select %p201, %s202, %s203
      %p207 = pneg %p201
      %p208 = scmp.eq.s32.totalorder %s16, 1
      %p209 = por %p207, %p208
      %p210 = scmp.ne.s32.totalorder %s202, %s205
      %p211 = scmp.eq.s32.totalorder %s16, 0
      %p212 = por %p210, %p211
      %p213 = scmp.ne.s32.totalorder %s202, %s205
      %p214 = scmp.eq.s32.totalorder %s21, 1
      %p215 = por %p213, %p214
      %p216 = scmp.ne.s32.totalorder %s205, %s206
      %p217 = scmp.eq.s32.totalorder %s21, 0
      %p218 = por %p216, %p217
      %p219 = scmp.ne.s32.totalorder %s205, %s206
      %p220 = scmp.eq.s32.totalorder %s22, 1
      %p221 = por %p219, %p220
      %p223 = scmp.ne.s32.totalorder %s206, %s222
      %p224 = scmp.eq.s32.totalorder %s22, 0
      %p225 = por %p223, %p224
      %p226 = scmp.le.s32.totalorder 1, %s16
      %p227 = scmp.lt.s32.totalorder %s16, 3
      %p228 = pnand %p226, %p227
      %p229 = pneg %p228
      // Predicated region
      $region9: #{tpu_custom_call.1} parent=5 // pred_check
        _
      $region10: #{tpu_custom_call.1} parent=5 // pred_check_branch
        %231 = sbr.rel (%p228) target = $region12
      $region11: #{tpu_custom_call.1} parent=5 // pred_region
        %s232 = ssub.s32 %s16, 1
        // Predicated region
        $region13: #{tpu_custom_call.1} parent=11 // pred_check
          %p233 = pneg %p75
        $region14: #{tpu_custom_call.1} parent=11 // pred_check_branch
          %235 = sbr.rel (%p233) target = $region16
        $region15: #{tpu_custom_call.1} parent=11 // pred_region
          _
        $region16: #{tpu_custom_call.1} parent=11 // pred_fallthru
          _
        // Predicated region
        $region17: #{tpu_custom_call.1} parent=11 // pred_check
          %p236 = pneg %p96
        $region18: #{tpu_custom_call.1} parent=11 // pred_check_branch
          %238 = sbr.rel (%p236) target = $region20
        $region19: #{tpu_custom_call.1} parent=11 // pred_region
          _
        $region20: #{tpu_custom_call.1} parent=11 // pred_fallthru
          _
        // Predicated region
        $region21: #{tpu_custom_call.1} parent=11 // pred_check
          %p239 = pneg %p117
        $region22: #{tpu_custom_call.1} parent=11 // pred_check_branch
          %241 = sbr.rel (%p239) target = $region24
        $region23: #{tpu_custom_call.1} parent=11 // pred_region
          _
        $region24: #{tpu_custom_call.1} parent=11 // pred_fallthru
          _
        // Predicated region
        $region25: #{tpu_custom_call.1} parent=11 // pred_check
          %p242 = pneg %p138
        $region26: #{tpu_custom_call.1} parent=11 // pred_check_branch
          %244 = sbr.rel (%p242) target = $region28
        $region27: #{tpu_custom_call.1} parent=11 // pred_region
          _
        $region28: #{tpu_custom_call.1} parent=11 // pred_fallthru
          _
        // Predicated region
        $region29: #{tpu_custom_call.1} parent=11 // pred_check
          %p245 = pneg %p164
        $region30: #{tpu_custom_call.1} parent=11 // pred_check_branch
          %247 = sbr.rel (%p245) target = $region32
        $region31: #{tpu_custom_call.1} parent=11 // pred_region
          %s248 = smul.u32 16, %s26
          %p249 = scmp.lt.s32.totalorder %s248, 15
          %s250 = scalar_select %p249, %s248, 15
          %s251 = smul.addr %s250, 4
          %s252 = scalar_lea.vmem %s5, %s251
          %s253 = smul.u32 16, %s26
        $region32: #{tpu_custom_call.1} parent=11 // pred_fallthru
          _
        // Predicated region
        $region33: #{tpu_custom_call.1} parent=11 // pred_check
          %p254 = pneg %p190
        $region34: #{tpu_custom_call.1} parent=11 // pred_check_branch
          %256 = sbr.rel (%p254) target = $region36
        $region35: #{tpu_custom_call.1} parent=11 // pred_region
          %p257 = scmp.lt.s32.totalorder %s26, 0
          %s258 = scalar_select %p257, %s26, 0
          %s259 = scalar_lea.vmem %s6, %s258
        $region36: #{tpu_custom_call.1} parent=11 // pred_fallthru
          _
      $region12: #{tpu_custom_call.1} parent=5 // pred_fallthru
        _
      %p260 = scmp.lt.s32.totalorder %s16, 2
      // Predicated region
      $region37: #{tpu_custom_call.1} parent=5 // pred_check
        %p261 = pneg %p260
      $region38: #{tpu_custom_call.1} parent=5 // pred_check_branch
        %263 = sbr.rel (%p261) target = $region40
      $region39: #{tpu_custom_call.1} parent=5 // pred_region
        // Predicated region
        $region41: #{tpu_custom_call.1} parent=39 // pred_check
          %p264 = pneg %p48
        $region42: #{tpu_custom_call.1} parent=39 // pred_check_branch
          %266 = sbr.rel (%p264) target = $region44
        $region43: #{tpu_custom_call.1} parent=39 // pred_region
          %p267 = scmp.lt.s32.totalorder %s23, 1
          %s268 = scalar_select %p267, %s23, 1
          %s269 = smul.addr %s268, 8
          %s270 = scalar_lea.vmem %s0, %s269
        $region44: #{tpu_custom_call.1} parent=39 // pred_fallthru
          _
      $region40: #{tpu_custom_call.1} parent=5 // pred_fallthru
        _
      %p271 = scmp.le.s32.totalorder 1, %s16
      %p272 = scmp.lt.s32.totalorder %s16, 3
      %p273 = pnand %p271, %p272
      %p274 = pneg %p273
      // Predicated region
      $region45: #{tpu_custom_call.1} parent=5 // pred_check
        _
      $region46: #{tpu_custom_call.1} parent=5 // pred_check_branch
        %276 = sbr.rel (%p273) target = $region48
      $region47: #{tpu_custom_call.1} parent=5 // pred_region
        %s277 = ssub.s32 %s16, 1
        %p278 = scmp.lt.s32.totalorder %s25, 1
        %s279 = scalar_select %p278, %s25, 1
        %s280 = smul.addr %s279, 8
        %s281 = scalar_lea.vmem %s0, %s280
        %p282 = pneg %p54
        %p283 = pneg %p51
        %p284 = pneg %p75
        %p285 = pneg %p72
        %p286 = pneg %p96
        %p287 = pneg %p93
        %p288 = pneg %p117
        %p289 = pneg %p114
        %p290 = pneg %p138
        %p291 = pneg %p135
        %s292 = smul.u32 16, %s26
        %p293 = scmp.lt.s32.totalorder %s292, 15
        %s294 = scalar_select %p293, %s292, 15
        %s295 = smul.addr %s294, 4
        %s296 = scalar_lea.vmem %s5, %s295
        %p297 = pneg %p164
        %p298 = pneg %p161
        %p299 = scmp.lt.s32.totalorder %s26, 0
        %s300 = scalar_select %p299, %s26, 0
        %s301 = scalar_lea.vmem %s6, %s300
        %p302 = pneg %p190
        %p303 = pneg %p187
        %p304 = pneg %p218
        %p305 = pneg %p215
        %s306 = sand.u32 %s205, 1
        %s307 = scalar_lea.sflag [#allocation4], %s306
        %s308 = sand.u32 %s205, 1
        %s309 = smul.addr %s308, 8
        %s310 = scalar_lea.vmem [#allocation3], %s309
        %p311 = scmp.lt.s32.totalorder %s25, 1
        %s312 = scalar_select %p311, %s25, 1
        %s313 = smul.addr %s312, 8
        %s314 = scalar_lea.vmem %s0, %s313
        %s315 = smul.u32 16, %s26
        %p316 = scmp.lt.s32.totalorder %s315, 15
        %s317 = scalar_select %p316, %s315, 15
        %s318 = smul.addr %s317, 4
        %s319 = scalar_lea.vmem %s5, %s318
        %s320 = smul.u32 16, %s26
        %p321 = scmp.lt.s32.totalorder %s26, 0
        %s322 = scalar_select %p321, %s26, 0
        %s323 = scalar_lea.vmem %s6, %s322
        %p325 = scmp.eq.s32.totalorder %s26, 0
        // Predicated region
        $region49: #{tpu_custom_call.1} parent=47 // pred_check
          %p326 = pneg %p325
        $region50: #{tpu_custom_call.1} parent=47 // pred_check_branch
          %328 = sbr.rel (%p326) target = $region52
        $region51: #{tpu_custom_call.1} parent=47 // pred_region
          %v329 = vld [vmem:[%s314] sm:$0xff]
          %v330 = vpack.c.bf16 %v329, %v329
          %v331 = vld [vmem:[%s1] sm:$0xf]
          %v332 = vld [vmem:[%s1 + $0x4] sm:$0xf]
          %v333 = vld [vmem:[%s1 + $0x8] sm:$0xf]
          %v334 = vld [vmem:[%s1 + $0xc] sm:$0xf]
          %v335 = vld [vmem:[%s2] sm:$0x1]
          %v337 = vlaneseq
          %v338 = vshrl.u32 %v337, 7
          %v339 = vsub.s32 0, %v338
          %v340 = vrot.slane %v335, %v339
          %v346 = vunpack.c.l.b16 %v331
          %v347 = vunpack.c.l.b16 %v332
          %v348 = vunpack.c.l.b16 %v333
          %v349 = vunpack.c.l.b16 %v334
          %v350 = vpack.c.b16 %v347, %v346
          %v351 = vpack.c.b16 %v349, %v348
          %vm352 = vcmask 261120
          %v354 = vsel %vm352, %v330, 0
          %v357 = vsel %vm352, %v350, 0
          %v360 = vsel %vm352, %v351, 0
          %362 = vmatprep.subr.bf16.mxu0 0
          %363 = vmatpush1.bf16.xpose.msra.mxu0 0
          %364 = vmatprep.subr.bf16.mxu0 0
          %365 = vmatpush1.bf16.xpose.msra.mxu0 0
          %366 = vmatprep.subr.bf16.mxu0 0
          %367 = vmatpush1.bf16.xpose.msra.mxu0 0
          %368 = vmatprep.subr.bf16.mxu0 0
          %369 = vmatpush1.bf16.xpose.msra.mxu0 0
          %370 = vmatprep.subr.bf16.mxu0 0
          %371 = vmatpush1.bf16.xpose.msra.mxu0 0
          %372 = vmatprep.subr.bf16.mxu0 0
          %373 = vmatpush1.bf16.xpose.msra.mxu0 0
          %374 = vmatprep.subr.bf16.mxu0 0
          %375 = vmatpush1.bf16.xpose.msra.mxu0 %v360
          %376 = vmatprep.subr.bf16.mxu0 0
          %377 = vmatpush1.bf16.xpose.msra.mxu0 %v357
          %378 = vmatprep.subr.bf16.mxu0 0
          %379 = vmatpush2.bf16.xpose.msra.mxu0 0
          %380 = vmatprep.subr.bf16.mxu0 0
          %381 = vmatpush2.bf16.xpose.msra.mxu0 0
          %382 = vmatprep.subr.bf16.mxu0 0
          %383 = vmatpush2.bf16.xpose.msra.mxu0 0
          %384 = vmatprep.subr.bf16.mxu0 0
          %385 = vmatpush2.bf16.xpose.msra.mxu0 0
          %386 = vmatprep.subr.bf16.mxu0 0
          %387 = vmatpush2.bf16.xpose.msra.mxu0 0
          %388 = vmatprep.subr.bf16.mxu0 0
          %389 = vmatpush2.bf16.xpose.msra.mxu0 0
          %390 = vmatprep.subr.bf16.mxu0 0
          %391 = vmatpush2.bf16.xpose.msra.mxu0 0
          %392 = vmatprep.subr.bf16.mxu0 0
          %393 = vmatpush2.bf16.xpose.msra.mxu0 0
          %394 = vmatprep.mubr.bf16.mxu0 0
          %395 = vmatmul.mubr.bf16.gmra.mxu0 %v354
          %v396 = vpop.f32.mrf.mxu0
          %v397 = vadd.f32 %v340, %v396
          %v398 = vpop.f32.mrf.mxu0
          %v399 = vpop.f32.mrf.mxu0
          %v400 = vpop.f32.mrf.mxu0
          %401 = vdwg.mxu0
          %v402 = vmul.f32 %v397, 0.5
          %v403 = vmul.f32 %v397, 0.70710677
          %vm404 = vcmp.ge.f32.partialorder %v403, 0.0
          %v405 = vsel %vm404, 1.0, -1.0
          %v406 = vand.u32 2147483647, %v403
          %v407 = vmul.f32 %v406, 0.3275911
          %v408 = vadd.f32 %v407, 1.0
          %v409 = vrcp.pop %v408
          %v410 = vmul.f32 1.0, %v409
          %v411 = vmul.f32 %v410, 1.0614054
          %v412 = vadd.f32 %v411, -1.4531521
          %v413 = vmul.f32 %v412, %v410
          %v414 = vadd.f32 %v413, 1.4214138
          %v415 = vmul.f32 %v414, %v410
          %v416 = vadd.f32 %v415, -0.28449672
          %v417 = vmul.f32 %v416, %v410
          %v418 = vadd.f32 %v417, 0.2548296
          %v419 = vmul.f32 %v418, %v410
          %v420 = vsub.f32 0.0, %v406
          %v421 = vmul.f32 %v420, %v406
          %v422 = vmul.f32 %v421, 1.442695
          %v423 = vpow.pop %v422
          %v424 = vmul.f32 %v419, %v423
          %v425 = vsub.f32 1.0, %v424
          %v426 = vmul.f32 %v405, %v425
          %v427 = vadd.f32 %v426, 1.0
          %v428 = vmul.f32 %v402, %v427
          %v429 = vsel %vm352, %v428, 0.0
          %430 = vadd.xlane.f32.xlu0 %v429
          %v431 = vpop.xlane.xlu0 %430
          %v432 = vmul.f32 %v431, 0.03125
          %v433 = vmul.f32 %v428, %v428
          %v434 = vsel %vm352, %v433, 0.0
          %435 = vadd.xlane.f32.xlu0 %v434
          %v436 = vpop.xlane.xlu0 %435
          %v437 = vmul.f32 %v436, 0.03125
          %v438 = vmul.f32 %v432, %v432
          %v439 = vsub.f32 %v437, %v438
          %v440 = vmax.f32 %v439, 0.0
          %v441 = vsub.f32 %v428, %v432
          %v442 = vadd.f32 %v440, 1e-12
          %v443 = vrsqrt.pop %v442
          %v444 = vmul.f32 %v441, %v443
          %v445 = vld [vmem:[%s3] sm:$0x1]
          %v447 = vlaneseq
          %v448 = vshrl.u32 %v447, 7
          %v449 = vsub.s32 0, %v448
          %v450 = vrot.slane %v445, %v449
          %v452 = vmul.f32 %v444, %v450
          %v453 = vld [vmem:[%s4] sm:$0x1]
          %v455 = vlaneseq
          %v456 = vshrl.u32 %v455, 7
          %v457 = vsub.s32 0, %v456
          %v458 = vrot.slane %v453, %v457
          %v460 = vadd.f32 %v452, %v458
          %v461 = vpack.c.bf16 %v460, %v460
          %vm462 = vcmask 257024
          %463 = vst.msk [vmem:[#allocation2] sm:$0xf] %vm462, %v461
        $region52: #{tpu_custom_call.1} parent=47 // pred_fallthru
          _
        %v464 = vld [vmem:[#allocation2] sm:$0xf]
        %v465 = vld [vmem:[%s319] sm:$0xf]
        %v466 = vld [vmem:[%s319 + $0x4] sm:$0xf]
        %v467 = vld [vmem:[%s319 + $0x8] sm:$0xf]
        %v468 = vld [vmem:[%s319 + $0xc] sm:$0xf]
        %v469 = vld [vmem:[%s319 + $0x10] sm:$0xf]
        %v470 = vld [vmem:[%s319 + $0x14] sm:$0xf]
        %v471 = vld [vmem:[%s319 + $0x18] sm:$0xf]
        %v472 = vld [vmem:[%s319 + $0x1c] sm:$0xf]
        %v473 = vld [vmem:[%s319 + $0x20] sm:$0xf]
        %v474 = vld [vmem:[%s319 + $0x24] sm:$0xf]
        %v475 = vld [vmem:[%s319 + $0x28] sm:$0xf]
        %v476 = vld [vmem:[%s319 + $0x2c] sm:$0xf]
        %v477 = vld [vmem:[%s319 + $0x30] sm:$0xf]
        %v478 = vld [vmem:[%s319 + $0x34] sm:$0xf]
        %v479 = vld [vmem:[%s319 + $0x38] sm:$0xf]
        %v480 = vld [vmem:[%s319 + $0x3c] sm:$0xf]
        %v481 = vld [vmem:[%s323] sm:$0x1]
        %v483 = vlaneseq
        %v484 = vshrl.u32 %v483, 7
        %v485 = vsub.s32 0, %v484
        %v486 = vrot.slane %v481, %v485
        %v504 = vunpack.c.l.b16 %v465
        %v505 = vunpack.c.l.b16 %v466
        %v506 = vunpack.c.l.b16 %v467
        %v507 = vunpack.c.l.b16 %v468
        %v508 = vunpack.c.l.b16 %v469
        %v509 = vunpack.c.l.b16 %v470
        %v510 = vunpack.c.l.b16 %v471
        %v511 = vunpack.c.l.b16 %v472
        %v512 = vunpack.c.l.b16 %v473
        %v513 = vunpack.c.l.b16 %v474
        %v514 = vunpack.c.l.b16 %v475
        %v515 = vunpack.c.l.b16 %v476
        %v516 = vunpack.c.l.b16 %v477
        %v517 = vunpack.c.l.b16 %v478
        %v518 = vunpack.c.l.b16 %v479
        %v519 = vunpack.c.l.b16 %v480
        %v520 = vpack.c.b16 %v505, %v504
        %v521 = vpack.c.b16 %v507, %v506
        %v522 = vpack.c.b16 %v509, %v508
        %v523 = vpack.c.b16 %v511, %v510
        %v524 = vpack.c.b16 %v513, %v512
        %v525 = vpack.c.b16 %v515, %v514
        %v526 = vpack.c.b16 %v517, %v516
        %v527 = vpack.c.b16 %v519, %v518
        %vm528 = vcmask 261120
        %v530 = vsel %vm528, %v464, 0
        %v533 = vsel %vm528, %v520, 0
        %v536 = vsel %vm528, %v521, 0
        %v539 = vsel %vm528, %v522, 0
        %v542 = vsel %vm528, %v523, 0
        %v545 = vsel %vm528, %v524, 0
        %v548 = vsel %vm528, %v525, 0
        %v551 = vsel %vm528, %v526, 0
        %v554 = vsel %vm528, %v527, 0
        %556 = vmatprep.subr.bf16.mxu0 0
        %557 = vmatpush1.bf16.xpose.msra.mxu0 %v554
        %558 = vmatprep.subr.bf16.mxu0 0
        %559 = vmatpush1.bf16.xpose.msra.mxu0 %v551
        %560 = vmatprep.subr.bf16.mxu0 0
        %561 = vmatpush1.bf16.xpose.msra.mxu0 %v548
        %562 = vmatprep.subr.bf16.mxu0 0
        %563 = vmatpush1.bf16.xpose.msra.mxu0 %v545
        %564 = vmatprep.subr.bf16.mxu0 0
        %565 = vmatpush1.bf16.xpose.msra.mxu0 %v542
        %566 = vmatprep.subr.bf16.mxu0 0
        %567 = vmatpush1.bf16.xpose.msra.mxu0 %v539
        %568 = vmatprep.subr.bf16.mxu0 0
        %569 = vmatpush1.bf16.xpose.msra.mxu0 %v536
        %570 = vmatprep.subr.bf16.mxu0 0
        %571 = vmatpush1.bf16.xpose.msra.mxu0 %v533
        %572 = vmatprep.subr.bf16.mxu0 0
        %573 = vmatpush2.bf16.xpose.msra.mxu0 0
        %574 = vmatprep.subr.bf16.mxu0 0
        %575 = vmatpush2.bf16.xpose.msra.mxu0 0
        %576 = vmatprep.subr.bf16.mxu0 0
        %577 = vmatpush2.bf16.xpose.msra.mxu0 0
        %578 = vmatprep.subr.bf16.mxu0 0
        %579 = vmatpush2.bf16.xpose.msra.mxu0 0
        %580 = vmatprep.subr.bf16.mxu0 0
        %581 = vmatpush2.bf16.xpose.msra.mxu0 0
        %582 = vmatprep.subr.bf16.mxu0 0
        %583 = vmatpush2.bf16.xpose.msra.mxu0 0
        %584 = vmatprep.subr.bf16.mxu0 0
        %585 = vmatpush2.bf16.xpose.msra.mxu0 0
        %586 = vmatprep.subr.bf16.mxu0 0
        %587 = vmatpush2.bf16.xpose.msra.mxu0 0
        %588 = vmatprep.mubr.bf16.mxu0 0
        %589 = vmatmul.mubr.bf16.gmra.mxu0 %v530
        %v590 = vpop.f32.mrf.mxu0
        %v591 = vadd.f32 %v486, %v590
        %v592 = vpop.f32.mrf.mxu0
        %v593 = vpop.f32.mrf.mxu0
        %v594 = vpop.f32.mrf.mxu0
        %595 = vdwg.mxu0
        %596 = vst [vmem:[%s310] sm:$0xff] %v591
        %s597 = sand.u32 %s205, 1
        %s598 = scalar_lea.sflag [#allocation4], %s597
        %s599 = sand.u32 %s205, 1
        %s600 = smul.addr %s599, 8
        %s601 = scalar_lea.vmem [#allocation3], %s600
        // Predicated region
        $region53: #{tpu_custom_call.1} parent=47 // pred_check
          %p602 = pneg %p215
        $region54: #{tpu_custom_call.1} parent=47 // pred_check_branch
          %604 = sbr.rel (%p602) target = $region56
        $region55: #{tpu_custom_call.1} parent=47 // pred_region
          %s606 = ssub.s32 128, 128
          %607 = vsyncadd %s598, %s606
          %s608 = sadd.s32 %s26, %s25
          %s609 = smul.addr %s608, 128
          %s610 = scalar_lea.hbm %s7, %s609
          %s612 = sshll.u32 %s601, 4
          %s613 = int_to_ptr.vmem [resolvable:$true] %s612
          %615 = dma.vmem_to_hbm [thread:$0]  %s613, 128, %s610, %s598
        $region56: #{tpu_custom_call.1} parent=47 // pred_fallthru
          _
      $region48: #{tpu_custom_call.1} parent=5 // pred_fallthru
        _
      %p616 = scmp.le.s32.totalorder 2, %s16
      // Predicated region
      $region57: #{tpu_custom_call.1} parent=5 // pred_check
        %p617 = pneg %p616
      $region58: #{tpu_custom_call.1} parent=5 // pred_check_branch
        %619 = sbr.rel (%p617) target = $region60
      $region59: #{tpu_custom_call.1} parent=5 // pred_region
        %s620 = ssub.s32 %s16, 2
        // Predicated region
        $region61: #{tpu_custom_call.1} parent=59 // pred_check
          %p621 = pneg %p221
        $region62: #{tpu_custom_call.1} parent=59 // pred_check_branch
          %623 = sbr.rel (%p621) target = $region64
        $region63: #{tpu_custom_call.1} parent=59 // pred_region
          %s624 = sand.u32 %s206, 1
          %s625 = scalar_lea.sflag [#allocation4], %s624
          %s626 = sand.u32 %s206, 1
          %s627 = smul.addr %s626, 8
          %s628 = scalar_lea.vmem [#allocation3], %s627
          %629 = dma.done %s625, 128
        $region64: #{tpu_custom_call.1} parent=59 // pred_fallthru
          _
      $region60: #{tpu_custom_call.1} parent=5 // pred_fallthru
        _
    $region6: #{tpu_custom_call.1} parent=1 // loop_footer
      %s20 = sadd.s32 1, %s16
    $region7: #{tpu_custom_call.1} parent=1 // loop_footer_branch
      %15 = sbr.rel target = $region3
    $region8: #{tpu_custom_call.1} parent=1 // loop_exit
      _
    %630 = vsyncpa [#allocation4], 1
    %s631 = scalar_lea.sflag [#allocation4], 1
    %632 = vsyncpa %s631, 1

// kernel: tpu_custom_call.1
$region0: #{tpu_custom_call.1}
  #allocation0 [shape = 'u32[]', space=smem, size = 0x4, offset = 0x4, fixed_abs, tag = 'smem constant byte address 0x4 - core index']
  #allocation1 [shape = 'u32[144,128]{1,0:T(1,128)}', space=vmem, size = 0x12000, scoped, tag = 'internal scratch']
  #allocation2 [shape = 'bf16[8,32]{1,0:T(8,128)(2,1)}', space=vmem, size = 0x800, scoped, tag = 'scratch operand']
  %s0 = inlined_call_operand.vmem [shape: f32[16,32], index: 0, kind: input, shape index: {}]
  %s1 = inlined_call_operand.vmem [shape: bf16[32,32], index: 1, kind: input, shape index: {}]
  %s2 = inlined_call_operand.vmem [shape: f32[1,32], index: 2, kind: input, shape index: {}]
  %s3 = inlined_call_operand.vmem [shape: f32[1,32], index: 3, kind: input, shape index: {}]
  %s4 = inlined_call_operand.vmem [shape: f32[1,32], index: 4, kind: input, shape index: {}]
  %s5 = inlined_call_operand.vmem [shape: bf16[128,32], index: 5, kind: input, shape index: {}]
  %s6 = inlined_call_operand.vmem [shape: f32[1,128], index: 6, kind: input, shape index: {}]
  %s7 = inlined_call_operand.hbm [shape: f32[16,128], index: 7, kind: output, shape index: {}]
  %s8 = sld [smem:[#allocation0]]
  $region65: #{tpu_custom_call.1} parent=0
    _
  %s10 = ssub.s32 1, %s8
  %s11 = scalar_select 0, %s10, %s8
  $region1: #{tpu_custom_call.1} parent=0
    #allocation3 [shape = 'u8[8192]{0}', space=vmem, size = 0x2000, scoped, tag = 'output window, operand 0']
    #allocation4 [shape = 's32[2]{0}', space=sflag, size = 0x8, scoped, tag = 'scoped memory for tpu_custom_call.1']
    %12 = vsyncpa [#allocation4], 0
    %s13 = scalar_lea.sflag [#allocation4], 1
    %14 = vsyncpa %s13, 0
    loop: start=0, step=1, limit=4
    $region2: #{tpu_custom_call.1} parent=1 // loop_pre_header
      _
    $region3: #{tpu_custom_call.1} parent=1 // loop_header
      %s16 = sphi 0, %s20
      %p17 = scmp.ge.s32.totalorder %s16, 4
      %s23 = sphi 0, %s35
      %s24 = sphi 0, %s31
      %s25 = sphi 0, %s23
      %s26 = sphi 0, %s24
      %s27 = sphi 0, %s25
      %s28 = sphi 0, %s26
      %s38 = sphi 0, %s40
      %s41 = sphi 0, %s38
      %s42 = sphi 0, %s41
      %s58 = sphi 0, %s42
      %s62 = sphi 0, %s62
      %s64 = sphi 0, %s62
      %s65 = sphi 0, %s64
      %s79 = sphi 0, %s65
      %s83 = sphi 0, %s83
      %s85 = sphi 0, %s83
      %s86 = sphi 0, %s85
      %s100 = sphi 0, %s86
      %s104 = sphi 0, %s104
      %s106 = sphi 0, %s104
      %s107 = sphi 0, %s106
      %s121 = sphi 0, %s107
      %s125 = sphi 0, %s125
      %s127 = sphi 0, %s125
      %s128 = sphi 0, %s127
      %s142 = sphi 0, %s128
      %s148 = sphi 0, %s150
      %s151 = sphi 0, %s148
      %s152 = sphi 0, %s151
      %s168 = sphi 0, %s152
      %s174 = sphi 0, %s176
      %s177 = sphi 0, %s174
      %s178 = sphi 0, %s177
      %s194 = sphi 0, %s178
      %s202 = sphi 0, %s204
      %s205 = sphi 0, %s202
      %s206 = sphi 0, %s205
      %s222 = sphi 0, %s206
    $region4: #{tpu_custom_call.1} parent=1 // loop_header_branch
      %19 = sbr.rel (%p17) target = $region8
    $region5: #{tpu_custom_call.1} parent=1 // loop_body
      %s21 = ssub.s32 %s16, 1
      %s22 = ssub.s32 %s16, 2
      %s29 = sadd.s32 1, %s24
      %p30 = scmp.ge.s32.totalorder %s29, 1
      %s31 = scalar_select %p30, 0, %s29
      %s32 = sadd.s32 1, %s23
      %s33 = scalar_select %p30, %s32, %s23
      %p34 = scmp.ge.s32.totalorder %s33, 2
      %s35 = scalar_select %p34, 0, %s33
      %s36 = ssub.s32 %s23, %s35
      %p37 = scmp.eq.s32.totalorder %s36, 0
      %s39 = sadd.s32 %s38, 1
      %s40 = scalar_select %p37, %s38, %s39
      %p43 = pneg %p37
      %p44 = scmp.eq.s32.totalorder %s16, 1
      %p45 = por %p43, %p44
      %p46 = scmp.ne.s32.totalorder %s38, %s41
      %p47 = scmp.eq.s32.totalorder %s16, 0
      %p48 = por %p46, %p47
      %p49 = scmp.ne.s32.totalorder %s38, %s41
      %p50 = scmp.eq.s32.totalorder %s21, 1
      %p51 = por %p49, %p50
      %p52 = scmp.ne.s32.totalorder %s41, %s42
      %p53 = scmp.eq.s32.totalorder %s21, 0
      %p54 = por %p52, %p53
      %p55 = scmp.ne.s32.totalorder %s41, %s42
      %p56 = scmp.eq.s32.totalorder %s22, 1
      %p57 = por %p55, %p56
      %p59 = scmp.ne.s32.totalorder %s42, %s58
      %p60 = scmp.eq.s32.totalorder %s22, 0
      %p61 = por %p59, %p60
      %s63 = sadd.s32 %s62, 1
      %p66 = scmp.eq.s32.totalorder %s16, 1
      %p67 = scmp.ne.s32.totalorder %s62, %s64
      %p68 = scmp.eq.s32.totalorder %s16, 0
      %p69 = por %p67, %p68
      %p70 = scmp.ne.s32.totalorder %s62, %s64
      %p71 = scmp.eq.s32.totalorder %s21, 1
      %p72 = por %p70, %p71
      %p73 = scmp.ne.s32.totalorder %s64, %s65
      %p74 = scmp.eq.s32.totalorder %s21, 0
      %p75 = por %p73, %p74
      %p76 = scmp.ne.s32.totalorder %s64, %s65
      %p77 = scmp.eq.s32.totalorder %s22, 1
      %p78 = por %p76, %p77
      %p80 = scmp.ne.s32.totalorder %s65, %s79
      %p81 = scmp.eq.s32.totalorder %s22, 0
      %p82 = por %p80, %p81
      %s84 = sadd.s32 %s83, 1
      %p87 = scmp.eq.s32.totalorder %s16, 1
      %p88 = scmp.ne.s32.totalorder %s83, %s85
      %p89 = scmp.eq.s32.totalorder %s16, 0
      %p90 = por %p88, %p89
      %p91 = scmp.ne.s32.totalorder %s83, %s85
      %p92 = scmp.eq.s32.totalorder %s21, 1
      %p93 = por %p91, %p92
      %p94 = scmp.ne.s32.totalorder %s85, %s86
      %p95 = scmp.eq.s32.totalorder %s21, 0
      %p96 = por %p94, %p95
      %p97 = scmp.ne.s32.totalorder %s85, %s86
      %p98 = scmp.eq.s32.totalorder %s22, 1
      %p99 = por %p97, %p98
      %p101 = scmp.ne.s32.totalorder %s86, %s100
      %p102 = scmp.eq.s32.totalorder %s22, 0
      %p103 = por %p101, %p102
      %s105 = sadd.s32 %s104, 1
      %p108 = scmp.eq.s32.totalorder %s16, 1
      %p109 = scmp.ne.s32.totalorder %s104, %s106
      %p110 = scmp.eq.s32.totalorder %s16, 0
      %p111 = por %p109, %p110
      %p112 = scmp.ne.s32.totalorder %s104, %s106
      %p113 = scmp.eq.s32.totalorder %s21, 1
      %p114 = por %p112, %p113
      %p115 = scmp.ne.s32.totalorder %s106, %s107
      %p116 = scmp.eq.s32.totalorder %s21, 0
      %p117 = por %p115, %p116
      %p118 = scmp.ne.s32.totalorder %s106, %s107
      %p119 = scmp.eq.s32.totalorder %s22, 1
      %p120 = por %p118, %p119
      %p122 = scmp.ne.s32.totalorder %s107, %s121
      %p123 = scmp.eq.s32.totalorder %s22, 0
      %p124 = por %p122, %p123
      %s126 = sadd.s32 %s125, 1
      %p129 = scmp.eq.s32.totalorder %s16, 1
      %p130 = scmp.ne.s32.totalorder %s125, %s127
      %p131 = scmp.eq.s32.totalorder %s16, 0
      %p132 = por %p130, %p131
      %p133 = scmp.ne.s32.totalorder %s125, %s127
      %p134 = scmp.eq.s32.totalorder %s21, 1
      %p135 = por %p133, %p134
      %p136 = scmp.ne.s32.totalorder %s127, %s128
      %p137 = scmp.eq.s32.totalorder %s21, 0
      %p138 = por %p136, %p137
      %p139 = scmp.ne.s32.totalorder %s127, %s128
      %p140 = scmp.eq.s32.totalorder %s22, 1
      %p141 = por %p139, %p140
      %p143 = scmp.ne.s32.totalorder %s128, %s142
      %p144 = scmp.eq.s32.totalorder %s22, 0
      %p145 = por %p143, %p144
      %s146 = ssub.s32 %s24, %s31
      %p147 = scmp.eq.s32.totalorder %s146, 0
      %s149 = sadd.s32 %s148, 1
      %s150 = scalar_select %p147, %s148, %s149
      %p153 = pneg %p147
      %p154 = scmp.eq.s32.totalorder %s16, 1
      %p155 = por %p153, %p154
      %p156 = scmp.ne.s32.totalorder %s148, %s151
      %p157 = scmp.eq.s32.totalorder %s16, 0
      %p158 = por %p156, %p157
      %p159 = scmp.ne.s32.totalorder %s148, %s151
      %p160 = scmp.eq.s32.totalorder %s21, 1
      %p161 = por %p159, %p160
      %p162 = scmp.ne.s32.totalorder %s151, %s152
      %p163 = scmp.eq.s32.totalorder %s21, 0
      %p164 = por %p162, %p163
      %p165 = scmp.ne.s32.totalorder %s151, %s152
      %p166 = scmp.eq.s32.totalorder %s22, 1
      %p167 = por %p165, %p166
      %p169 = scmp.ne.s32.totalorder %s152, %s168
      %p170 = scmp.eq.s32.totalorder %s22, 0
      %p171 = por %p169, %p170
      %s172 = ssub.s32 %s24, %s31
      %p173 = scmp.eq.s32.totalorder %s172, 0
      %s175 = sadd.s32 %s174, 1
      %s176 = scalar_select %p173, %s174, %s175
      %p179 = pneg %p173
      %p180 = scmp.eq.s32.totalorder %s16, 1
      %p181 = por %p179, %p180
      %p182 = scmp.ne.s32.totalorder %s174, %s177
      %p183 = scmp.eq.s32.totalorder %s16, 0
      %p184 = por %p182, %p183
      %p185 = scmp.ne.s32.totalorder %s174, %s177
      %p186 = scmp.eq.s32.totalorder %s21, 1
      %p187 = por %p185, %p186
      %p188 = scmp.ne.s32.totalorder %s177, %s178
      %p189 = scmp.eq.s32.totalorder %s21, 0
      %p190 = por %p188, %p189
      %p191 = scmp.ne.s32.totalorder %s177, %s178
      %p192 = scmp.eq.s32.totalorder %s22, 1
      %p193 = por %p191, %p192
      %p195 = scmp.ne.s32.totalorder %s178, %s194
      %p196 = scmp.eq.s32.totalorder %s22, 0
      %p197 = por %p195, %p196
      %s198 = ssub.s32 %s23, %s35
      %s199 = ssub.s32 %s24, %s31
      %s200 = sor.u32 %s198, %s199
      %p201 = scmp.eq.s32.totalorder %s200, 0
      %s203 = sadd.s32 %s202, 1
      %s204 = scalar_select %p201, %s202, %s203
      %p207 = pneg %p201
      %p208 = scmp.eq.s32.totalorder %s16, 1
      %p209 = por %p207, %p208
      %p210 = scmp.ne.s32.totalorder %s202, %s205
      %p211 = scmp.eq.s32.totalorder %s16, 0
      %p212 = por %p210, %p211
      %p213 = scmp.ne.s32.totalorder %s202, %s205
      %p214 = scmp.eq.s32.totalorder %s21, 1
      %p215 = por %p213, %p214
      %p216 = scmp.ne.s32.totalorder %s205, %s206
      %p217 = scmp.eq.s32.totalorder %s21, 0
      %p218 = por %p216, %p217
      %p219 = scmp.ne.s32.totalorder %s205, %s206
      %p220 = scmp.eq.s32.totalorder %s22, 1
      %p221 = por %p219, %p220
      %p223 = scmp.ne.s32.totalorder %s206, %s222
      %p224 = scmp.eq.s32.totalorder %s22, 0
      %p225 = por %p223, %p224
      %p226 = scmp.le.s32.totalorder 1, %s16
      %p227 = scmp.lt.s32.totalorder %s16, 3
      %p228 = pnand %p226, %p227
      %p229 = pneg %p228
      // Predicated region
      $region9: #{tpu_custom_call.1} parent=5 // pred_check
        _
      $region10: #{tpu_custom_call.1} parent=5 // pred_check_branch
        %231 = sbr.rel (%p228) target = $region12
      $region11: #{tpu_custom_call.1} parent=5 // pred_region
        %s232 = ssub.s32 %s16, 1
        // Predicated region
        $region13: #{tpu_custom_call.1} parent=11 // pred_check
          %p233 = pneg %p75
        $region14: #{tpu_custom_call.1} parent=11 // pred_check_branch
          %235 = sbr.rel (%p233) target = $region16
        $region15: #{tpu_custom_call.1} parent=11 // pred_region
          _
        $region16: #{tpu_custom_call.1} parent=11 // pred_fallthru
          _
        // Predicated region
        $region17: #{tpu_custom_call.1} parent=11 // pred_check
          %p236 = pneg %p96
        $region18: #{tpu_custom_call.1} parent=11 // pred_check_branch
          %238 = sbr.rel (%p236) target = $region20
        $region19: #{tpu_custom_call.1} parent=11 // pred_region
          _
        $region20: #{tpu_custom_call.1} parent=11 // pred_fallthru
          _
        // Predicated region
        $region21: #{tpu_custom_call.1} parent=11 // pred_check
          %p239 = pneg %p117
        $region22: #{tpu_custom_call.1} parent=11 // pred_check_branch
          %241 = sbr.rel (%p239) target = $region24
        $region23: #{tpu_custom_call.1} parent=11 // pred_region
          _
        $region24: #{tpu_custom_call.1} parent=11 // pred_fallthru
          _
        // Predicated region
        $region25: #{tpu_custom_call.1} parent=11 // pred_check
          %p242 = pneg %p138
        $region26: #{tpu_custom_call.1} parent=11 // pred_check_branch
          %244 = sbr.rel (%p242) target = $region28
        $region27: #{tpu_custom_call.1} parent=11 // pred_region
          _
        $region28: #{tpu_custom_call.1} parent=11 // pred_fallthru
          _
        // Predicated region
        $region29: #{tpu_custom_call.1} parent=11 // pred_check
          %p245 = pneg %p164
        $region30: #{tpu_custom_call.1} parent=11 // pred_check_branch
          %247 = sbr.rel (%p245) target = $region32
        $region31: #{tpu_custom_call.1} parent=11 // pred_region
          %s248 = smul.u32 16, %s26
          %p249 = scmp.lt.s32.totalorder %s248, 15
          %s250 = scalar_select %p249, %s248, 15
          %s251 = smul.addr %s250, 4
          %s252 = scalar_lea.vmem %s5, %s251
          %s253 = smul.u32 16, %s26
        $region32: #{tpu_custom_call.1} parent=11 // pred_fallthru
          _
        // Predicated region
        $region33: #{tpu_custom_call.1} parent=11 // pred_check
          %p254 = pneg %p190
        $region34: #{tpu_custom_call.1} parent=11 // pred_check_branch
          %256 = sbr.rel (%p254) target = $region36
        $region35: #{tpu_custom_call.1} parent=11 // pred_region
          %p257 = scmp.lt.s32.totalorder %s26, 0
          %s258 = scalar_select %p257, %s26, 0
          %s259 = scalar_lea.vmem %s6, %s258
        $region36: #{tpu_custom_call.1} parent=11 // pred_fallthru
          _
      $region12: #{tpu_custom_call.1} parent=5 // pred_fallthru
        _
      %p260 = scmp.lt.s32.totalorder %s16, 2
      // Predicated region
      $region37: #{tpu_custom_call.1} parent=5 // pred_check
        %p261 = pneg %p260
      $region38: #{tpu_custom_call.1} parent=5 // pred_check_branch
        %263 = sbr.rel (%p261) target = $region40
      $region39: #{tpu_custom_call.1} parent=5 // pred_region
        // Predicated region
        $region41: #{tpu_custom_call.1} parent=39 // pred_check
          %p264 = pneg %p48
        $region42: #{tpu_custom_call.1} parent=39 // pred_check_branch
          %266 = sbr.rel (%p264) target = $region44
        $region43: #{tpu_custom_call.1} parent=39 // pred_region
          %p267 = scmp.lt.s32.totalorder %s23, 1
          %s268 = scalar_select %p267, %s23, 1
          %s269 = smul.addr %s268, 8
          %s270 = scalar_lea.vmem %s0, %s269
        $region44: #{tpu_custom_call.1} parent=39 // pred_fallthru
          _
      $region40: #{tpu_custom_call.1} parent=5 // pred_fallthru
        _
      %p271 = scmp.le.s32.totalorder 1, %s16
      %p272 = scmp.lt.s32.totalorder %s16, 3
      %p273 = pnand %p271, %p272
      %p274 = pneg %p273
      // Predicated region
      $region45: #{tpu_custom_call.1} parent=5 // pred_check
        _
      $region46: #{tpu_custom_call.1} parent=5 // pred_check_branch
        %276 = sbr.rel (%p273) target = $region48
      $region47: #{tpu_custom_call.1} parent=5 // pred_region
        %s277 = ssub.s32 %s16, 1
        %p278 = scmp.lt.s32.totalorder %s25, 1
        %s279 = scalar_select %p278, %s25, 1
        %s280 = smul.addr %s279, 8
        %s281 = scalar_lea.vmem %s0, %s280
        %p282 = pneg %p54
        %p283 = pneg %p51
        %p284 = pneg %p75
        %p285 = pneg %p72
        %p286 = pneg %p96
        %p287 = pneg %p93
        %p288 = pneg %p117
        %p289 = pneg %p114
        %p290 = pneg %p138
        %p291 = pneg %p135
        %s292 = smul.u32 16, %s26
        %p293 = scmp.lt.s32.totalorder %s292, 15
        %s294 = scalar_select %p293, %s292, 15
        %s295 = smul.addr %s294, 4
        %s296 = scalar_lea.vmem %s5, %s295
        %p297 = pneg %p164
        %p298 = pneg %p161
        %p299 = scmp.lt.s32.totalorder %s26, 0
        %s300 = scalar_select %p299, %s26, 0
        %s301 = scalar_lea.vmem %s6, %s300
        %p302 = pneg %p190
        %p303 = pneg %p187
        %p304 = pneg %p218
        %p305 = pneg %p215
        %s306 = sand.u32 %s205, 1
        %s307 = scalar_lea.sflag [#allocation4], %s306
        %s308 = sand.u32 %s205, 1
        %s309 = smul.addr %s308, 8
        %s310 = scalar_lea.vmem [#allocation3], %s309
        %p311 = scmp.lt.s32.totalorder %s25, 1
        %s312 = scalar_select %p311, %s25, 1
        %s313 = smul.addr %s312, 8
        %s314 = scalar_lea.vmem %s0, %s313
        %s315 = smul.u32 16, %s26
        %p316 = scmp.lt.s32.totalorder %s315, 15
        %s317 = scalar_select %p316, %s315, 15
        %s318 = smul.addr %s317, 4
        %s319 = scalar_lea.vmem %s5, %s318
        %s320 = smul.u32 16, %s26
        %p321 = scmp.lt.s32.totalorder %s26, 0
        %s322 = scalar_select %p321, %s26, 0
        %s323 = scalar_lea.vmem %s6, %s322
        %p325 = scmp.eq.s32.totalorder %s26, 0
        // Predicated region
        $region49: #{tpu_custom_call.1} parent=47 // pred_check
          %p326 = pneg %p325
        $region50: #{tpu_custom_call.1} parent=47 // pred_check_branch
          %328 = sbr.rel (%p326) target = $region52
        $region51: #{tpu_custom_call.1} parent=47 // pred_region
          %v329 = vld [vmem:[%s314] sm:$0xff]
          %v330 = vpack.c.bf16 %v329, %v329
          %v331 = vld [vmem:[%s1] sm:$0xf]
          %v332 = vld [vmem:[%s1 + $0x4] sm:$0xf]
          %v333 = vld [vmem:[%s1 + $0x8] sm:$0xf]
          %v334 = vld [vmem:[%s1 + $0xc] sm:$0xf]
          %v335 = vld [vmem:[%s2] sm:$0x1]
          %v337 = vlaneseq
          %v338 = vshrl.u32 %v337, 7
          %v339 = vsub.s32 0, %v338
          %v340 = vrot.slane %v335, %v339
          %v346 = vunpack.c.l.b16 %v331
          %v347 = vunpack.c.l.b16 %v332
          %v348 = vunpack.c.l.b16 %v333
          %v349 = vunpack.c.l.b16 %v334
          %v350 = vpack.c.b16 %v347, %v346
          %v351 = vpack.c.b16 %v349, %v348
          %vm352 = vcmask 261120
          %v354 = vsel %vm352, %v330, 0
          %v357 = vsel %vm352, %v350, 0
          %v360 = vsel %vm352, %v351, 0
          %362 = vmatprep.subr.bf16.mxu0 0
          %363 = vmatpush1.bf16.xpose.msra.mxu0 0
          %364 = vmatprep.subr.bf16.mxu0 0
          %365 = vmatpush1.bf16.xpose.msra.mxu0 0
          %366 = vmatprep.subr.bf16.mxu0 0
          %367 = vmatpush1.bf16.xpose.msra.mxu0 0
          %368 = vmatprep.subr.bf16.mxu0 0
          %369 = vmatpush1.bf16.xpose.msra.mxu0 0
          %370 = vmatprep.subr.bf16.mxu0 0
          %371 = vmatpush1.bf16.xpose.msra.mxu0 0
          %372 = vmatprep.subr.bf16.mxu0 0
          %373 = vmatpush1.bf16.xpose.msra.mxu0 0
          %374 = vmatprep.subr.bf16.mxu0 0
          %375 = vmatpush1.bf16.xpose.msra.mxu0 %v360
          %376 = vmatprep.subr.bf16.mxu0 0
          %377 = vmatpush1.bf16.xpose.msra.mxu0 %v357
          %378 = vmatprep.subr.bf16.mxu0 0
          %379 = vmatpush2.bf16.xpose.msra.mxu0 0
          %380 = vmatprep.subr.bf16.mxu0 0
          %381 = vmatpush2.bf16.xpose.msra.mxu0 0
          %382 = vmatprep.subr.bf16.mxu0 0
          %383 = vmatpush2.bf16.xpose.msra.mxu0 0
          %384 = vmatprep.subr.bf16.mxu0 0
          %385 = vmatpush2.bf16.xpose.msra.mxu0 0
          %386 = vmatprep.subr.bf16.mxu0 0
          %387 = vmatpush2.bf16.xpose.msra.mxu0 0
          %388 = vmatprep.subr.bf16.mxu0 0
          %389 = vmatpush2.bf16.xpose.msra.mxu0 0
          %390 = vmatprep.subr.bf16.mxu0 0
          %391 = vmatpush2.bf16.xpose.msra.mxu0 0
          %392 = vmatprep.subr.bf16.mxu0 0
          %393 = vmatpush2.bf16.xpose.msra.mxu0 0
          %394 = vmatprep.mubr.bf16.mxu0 0
          %395 = vmatmul.mubr.bf16.gmra.mxu0 %v354
          %v396 = vpop.f32.mrf.mxu0
          %v397 = vadd.f32 %v340, %v396
          %v398 = vpop.f32.mrf.mxu0
          %v399 = vpop.f32.mrf.mxu0
          %v400 = vpop.f32.mrf.mxu0
          %401 = vdwg.mxu0
          %v402 = vmul.f32 %v397, 0.5
          %v403 = vmul.f32 %v397, 0.70710677
          %vm404 = vcmp.ge.f32.partialorder %v403, 0.0
          %v405 = vsel %vm404, 1.0, -1.0
          %v406 = vand.u32 2147483647, %v403
          %v407 = vmul.f32 %v406, 0.3275911
          %v408 = vadd.f32 %v407, 1.0
          %v409 = vrcp.pop %v408
          %v410 = vmul.f32 1.0, %v409
          %v411 = vmul.f32 %v410, 1.0614054
          %v412 = vadd.f32 %v411, -1.4531521
          %v413 = vmul.f32 %v412, %v410
          %v414 = vadd.f32 %v413, 1.4214138
          %v415 = vmul.f32 %v414, %v410
          %v416 = vadd.f32 %v415, -0.28449672
          %v417 = vmul.f32 %v416, %v410
          %v418 = vadd.f32 %v417, 0.2548296
          %v419 = vmul.f32 %v418, %v410
          %v420 = vsub.f32 0.0, %v406
          %v421 = vmul.f32 %v420, %v406
          %v422 = vmul.f32 %v421, 1.442695
          %v423 = vpow.pop %v422
          %v424 = vmul.f32 %v419, %v423
          %v425 = vsub.f32 1.0, %v424
          %v426 = vmul.f32 %v405, %v425
          %v427 = vadd.f32 %v426, 1.0
          %v428 = vmul.f32 %v402, %v427
          %v429 = vsel %vm352, %v428, 0.0
          %430 = vadd.xlane.f32.xlu0 %v429
          %v431 = vpop.xlane.xlu0 %430
          %v432 = vmul.f32 %v431, 0.03125
          %v433 = vmul.f32 %v428, %v428
          %v434 = vsel %vm352, %v433, 0.0
          %435 = vadd.xlane.f32.xlu0 %v434
          %v436 = vpop.xlane.xlu0 %435
          %v437 = vmul.f32 %v436, 0.03125
          %v438 = vmul.f32 %v432, %v432
          %v439 = vsub.f32 %v437, %v438
          %v440 = vmax.f32 %v439, 0.0
          %v441 = vsub.f32 %v428, %v432
          %v442 = vadd.f32 %v440, 1e-12
          %v443 = vrsqrt.pop %v442
          %v444 = vmul.f32 %v441, %v443
          %v445 = vld [vmem:[%s3] sm:$0x1]
          %v447 = vlaneseq
          %v448 = vshrl.u32 %v447, 7
          %v449 = vsub.s32 0, %v448
          %v450 = vrot.slane %v445, %v449
          %v452 = vmul.f32 %v444, %v450
          %v453 = vld [vmem:[%s4] sm:$0x1]
          %v455 = vlaneseq
          %v456 = vshrl.u32 %v455, 7
          %v457 = vsub.s32 0, %v456
          %v458 = vrot.slane %v453, %v457
          %v460 = vadd.f32 %v452, %v458
          %v461 = vpack.c.bf16 %v460, %v460
          %vm462 = vcmask 257024
          %463 = vst.msk [vmem:[#allocation2] sm:$0xf] %vm462, %v461
        $region52: #{tpu_custom_call.1} parent=47 // pred_fallthru
          _
        %v464 = vld [vmem:[#allocation2] sm:$0xf]
        %v465 = vld [vmem:[%s319] sm:$0xf]
        %v466 = vld [vmem:[%s319 + $0x4] sm:$0xf]
        %v467 = vld [vmem:[%s319 + $0x8] sm:$0xf]
        %v468 = vld [vmem:[%s319 + $0xc] sm:$0xf]
        %v469 = vld [vmem:[%s319 + $0x10] sm:$0xf]
        %v470 = vld [vmem:[%s319 + $0x14] sm:$0xf]
        %v471 = vld [vmem:[%s319 + $0x18] sm:$0xf]
        %v472 = vld [vmem:[%s319 + $0x1c] sm:$0xf]
        %v473 = vld [vmem:[%s319 + $0x20] sm:$0xf]
        %v474 = vld [vmem:[%s319 + $0x24] sm:$0xf]
        %v475 = vld [vmem:[%s319 + $0x28] sm:$0xf]
        %v476 = vld [vmem:[%s319 + $0x2c] sm:$0xf]
        %v477 = vld [vmem:[%s319 + $0x30] sm:$0xf]
        %v478 = vld [vmem:[%s319 + $0x34] sm:$0xf]
        %v479 = vld [vmem:[%s319 + $0x38] sm:$0xf]
        %v480 = vld [vmem:[%s319 + $0x3c] sm:$0xf]
        %v481 = vld [vmem:[%s323] sm:$0x1]
        %v483 = vlaneseq
        %v484 = vshrl.u32 %v483, 7
        %v485 = vsub.s32 0, %v484
        %v486 = vrot.slane %v481, %v485
        %v504 = vunpack.c.l.b16 %v465
        %v505 = vunpack.c.l.b16 %v466
        %v506 = vunpack.c.l.b16 %v467
        %v507 = vunpack.c.l.b16 %v468
        %v508 = vunpack.c.l.b16 %v469
        %v509 = vunpack.c.l.b16 %v470
        %v510 = vunpack.c.l.b16 %v471
        %v511 = vunpack.c.l.b16 %v472
        %v512 = vunpack.c.l.b16 %v473
        %v513 = vunpack.c.l.b16 %v474
        %v514 = vunpack.c.l.b16 %v475
        %v515 = vunpack.c.l.b16 %v476
        %v516 = vunpack.c.l.b16 %v477
        %v517 = vunpack.c.l.b16 %v478
        %v518 = vunpack.c.l.b16 %v479
        %v519 = vunpack.c.l.b16 %v480
        %v520 = vpack.c.b16 %v505, %v504
        %v521 = vpack.c.b16 %v507, %v506
        %v522 = vpack.c.b16 %v509, %v508
        %v523 = vpack.c.b16 %v511, %v510
        %v524 = vpack.c.b16 %v513, %v512
        %v525 = vpack.c.b16 %v515, %v514
        %v526 = vpack.c.b16 %v517, %v516
        %v527 = vpack.c.b16 %v519, %v518
        %vm528 = vcmask 261120
        %v530 = vsel %vm528, %v464, 0
        %v533 = vsel %vm528, %v520, 0
        %v536 = vsel %vm528, %v521, 0
        %v539 = vsel %vm528, %v522, 0
        %v542 = vsel %vm528, %v523, 0
        %v545 = vsel %vm528, %v524, 0
        %v548 = vsel %vm528, %v525, 0
        %v551 = vsel %vm528, %v526, 0
        %v554 = vsel %vm528, %v527, 0
        %556 = vmatprep.subr.bf16.mxu0 0
        %557 = vmatpush1.bf16.xpose.msra.mxu0 %v554
        %558 = vmatprep.subr.bf16.mxu0 0
        %559 = vmatpush1.bf16.xpose.msra.mxu0 %v551
        %560 = vmatprep.subr.bf16.mxu0 0
        %561 = vmatpush1.bf16.xpose.msra.mxu0 %v548
        %562 = vmatprep.subr.bf16.mxu0 0
        %563 = vmatpush1.bf16.xpose.msra.mxu0 %v545
        %564 = vmatprep.subr.bf16.mxu0 0
        %565 = vmatpush1.bf16.xpose.msra.mxu0 %v542
        %566 = vmatprep.subr.bf16.mxu0 0
        %567 = vmatpush1.bf16.xpose.msra.mxu0 %v539
        %568 = vmatprep.subr.bf16.mxu0 0
        %569 = vmatpush1.bf16.xpose.msra.mxu0 %v536
        %570 = vmatprep.subr.bf16.mxu0 0
        %571 = vmatpush1.bf16.xpose.msra.mxu0 %v533
        %572 = vmatprep.subr.bf16.mxu0 0
        %573 = vmatpush2.bf16.xpose.msra.mxu0 0
        %574 = vmatprep.subr.bf16.mxu0 0
        %575 = vmatpush2.bf16.xpose.msra.mxu0 0
        %576 = vmatprep.subr.bf16.mxu0 0
        %577 = vmatpush2.bf16.xpose.msra.mxu0 0
        %578 = vmatprep.subr.bf16.mxu0 0
        %579 = vmatpush2.bf16.xpose.msra.mxu0 0
        %580 = vmatprep.subr.bf16.mxu0 0
        %581 = vmatpush2.bf16.xpose.msra.mxu0 0
        %582 = vmatprep.subr.bf16.mxu0 0
        %583 = vmatpush2.bf16.xpose.msra.mxu0 0
        %584 = vmatprep.subr.bf16.mxu0 0
        %585 = vmatpush2.bf16.xpose.msra.mxu0 0
        %586 = vmatprep.subr.bf16.mxu0 0
        %587 = vmatpush2.bf16.xpose.msra.mxu0 0
        %588 = vmatprep.mubr.bf16.mxu0 0
        %589 = vmatmul.mubr.bf16.gmra.mxu0 %v530
        %v590 = vpop.f32.mrf.mxu0
        %v591 = vadd.f32 %v486, %v590
        %v592 = vpop.f32.mrf.mxu0
        %v593 = vpop.f32.mrf.mxu0
        %v594 = vpop.f32.mrf.mxu0
        %595 = vdwg.mxu0
        %596 = vst [vmem:[%s310] sm:$0xff] %v591
        %s597 = sand.u32 %s205, 1
        %s598 = scalar_lea.sflag [#allocation4], %s597
        %s599 = sand.u32 %s205, 1
        %s600 = smul.addr %s599, 8
        %s601 = scalar_lea.vmem [#allocation3], %s600
        // Predicated region
        $region53: #{tpu_custom_call.1} parent=47 // pred_check
          %p602 = pneg %p215
        $region54: #{tpu_custom_call.1} parent=47 // pred_check_branch
          %604 = sbr.rel (%p602) target = $region56
        $region55: #{tpu_custom_call.1} parent=47 // pred_region
          %s606 = ssub.s32 128, 128
          %607 = vsyncadd %s598, %s606
          %s608 = sadd.s32 %s26, %s25
          %s609 = smul.addr %s608, 128
          %s610 = scalar_lea.hbm %s7, %s609
          %s612 = sshll.u32 %s601, 4
          %s613 = int_to_ptr.vmem [resolvable:$true] %s612
          %615 = dma.vmem_to_hbm [thread:$0]  %s613, 128, %s610, %s598
        $region56: #{tpu_custom_call.1} parent=47 // pred_fallthru
          _
      $region48: #{tpu_custom_call.1} parent=5 // pred_fallthru
        _
      %p616 = scmp.le.s32.totalorder 2, %s16
      // Predicated region
      $region57: #{tpu_custom_call.1} parent=5 // pred_check
        %p617 = pneg %p616
      $region58: #{tpu_custom_call.1} parent=5 // pred_check_branch
        %619 = sbr.rel (%p617) target = $region60
      $region59: #{tpu_custom_call.1} parent=5 // pred_region
        %s620 = ssub.s32 %s16, 2
        // Predicated region
        $region61: #{tpu_custom_call.1} parent=59 // pred_check
          %p621 = pneg %p221
        $region62: #{tpu_custom_call.1} parent=59 // pred_check_branch
          %623 = sbr.rel (%p621) target = $region64
        $region63: #{tpu_custom_call.1} parent=59 // pred_region
          %s624 = sand.u32 %s206, 1
          %s625 = scalar_lea.sflag [#allocation4], %s624
          %s626 = sand.u32 %s206, 1
          %s627 = smul.addr %s626, 8
          %s628 = scalar_lea.vmem [#allocation3], %s627
          %629 = dma.done %s625, 128
        $region64: #{tpu_custom_call.1} parent=59 // pred_fallthru
          _
      $region60: #{tpu_custom_call.1} parent=5 // pred_fallthru
        _
    $region6: #{tpu_custom_call.1} parent=1 // loop_footer
      %s20 = sadd.s32 1, %s16
    $region7: #{tpu_custom_call.1} parent=1 // loop_footer_branch
      %15 = sbr.rel target = $region3
    $region8: #{tpu_custom_call.1} parent=1 // loop_exit
      _
    %630 = vsyncpa [#allocation4], 1
    %s631 = scalar_lea.sflag [#allocation4], 1
    %632 = vsyncpa %s631, 1

</llo_original>
